<compile_context>
chip_gen: v5e
topology: v5e:2x2
jax: 0.10.0
libtpu: 0.0.40
codegen_flags: <defaults>
</compile_context>

<pallas_src>
import math
from functools import partial

import jax
import jax.numpy as jnp
from jax.experimental import pallas as pl
from jax.experimental.pallas import tpu as pltpu


def _softmax_last(x):
    m = jnp.max(x, axis=-1, keepdims=True)
    e = jnp.exp(x - m)
    return e / jnp.sum(e, axis=-1, keepdims=True)


# =============================================================================
# ONE fused kernel for the whole Architecture forward.
# grid = (batch, layer); "parallel" batch axis (v7x megacore), "arbitrary"
# layer axis carrying the y / x activations in VMEM scratch.
# =============================================================================
def _arch_kernel(qa_ref, q_ref,
                 wkv_ref, bkv_ref, wo_ref, bo_ref,
                 g1_ref, b1_ref, w1_ref, fb1_ref, w2_ref, fb2_ref,
                 g2_ref, b2_ref,
                 dam_ref, comb_ref, gam_ref, zrow_ref,
                 cum_ref, pos_ref, hmask_ref,
                 o_ref,
                 y_buf, x_buf,
                 *, n_heads, n1):
    f32 = jnp.float32
    _, S, D = qa_ref.shape
    H = n_heads
    d_k = D // H
    D2 = 2 * D
    dff = w1_ref.shape[-1]
    neg = f32(-1e32)
    scale = f32(1.0 / math.sqrt(d_k))
    eps = f32(1e-5)

    l = pl.program_id(1)

    # ---- layer-0 state init: y <- qa_embed, x <- q_embed --------------------
    @pl.when(l == 0)
    def _():
        y_buf[...] = qa_ref[...]
        x_buf[...] = q_ref[...]

    # static layer schedule (n1 = len(blocks_1)):
    #   l <  n1                : blocks_1      (y path, FFN, bmask=1)
    #   l >= n1, (l-n1) even   : blocks_2 "flag_first" (x self, no FFN)
    #   l >= n1, (l-n1) odd    : blocks_2 second (x query, y values, zero_pad,
    #                            FFN, bmask=0)
    is_y = l < n1
    is_xself = jnp.logical_and(l >= n1, ((l - n1) & 1) == 0)

    y_st = y_buf[...].reshape(S, D)
    x_st = x_buf[...].reshape(S, D)

    q_cur = jnp.where(is_y, y_st, x_st)          # query (== key; kq_same = 1)
    v_cur = jnp.where(is_xself, x_st, y_st)      # values

    # ---- fused K|V projection: [q; v](2S,D) @ [wk|wv](D,2D) -----------------
    x2 = jnp.concatenate([q_cur, v_cur], axis=0)                     # (2S, D)
    kv = jnp.dot(x2, wkv_ref[...].reshape(D, D2),
                 preferred_element_type=f32) + bkv_ref[...].reshape(1, D2)
    k3 = kv[:S, :D]                              # K (== Q)          (S, D)
    v3 = kv[S:, D:]                              # V                 (S, D)

    # ---- heads batched on the leading dim via lane masks (no transposes) ----
    hm = hmask_ref[...]                          # (H, 1, D) head lane masks
    qm = k3[None] * hm                           # (H, S, D)
    kb = jnp.broadcast_to(k3[None], (H, S, D))
    vb = jnp.broadcast_to(v3[None], (H, S, D))

    scores = jnp.einsum('nqd,nkd->nqk', qm, kb,
                        preferred_element_type=f32) * scale          # (H,S,S)

    damf = dam_ref[...].reshape(H, S, S)         # 1 where dam keeps
    comb = comb_ref[...].reshape(H, S, S)        # mask * dam
    gam = gam_ref[...].reshape(H, S, S)          # -softplus(gamma), per head
    cum_mat = cum_ref[...]                       # (S,S) upper-tri ones
    pos_eff = pos_ref[...]                       # (S,S) |i-j|

    # "no-grad" distance branch (bug-compatible: only the dam fill survives)
    s_ = _softmax_last(jnp.where(damf > 0, scores, neg)) * comb
    distcum = jnp.dot(s_.reshape(H * S, S), cum_mat,
                      preferred_element_type=f32).reshape(H, S, S)
    disttotal = jnp.sum(s_, axis=-1, keepdims=True)
    dist = jnp.sqrt(jnp.maximum((disttotal - distcum) * pos_eff, 0.0))
    total_effect = jnp.clip(jnp.exp(dist * gam), 1e-5, 1e5)

    sc = _softmax_last(jnp.where(comb > 0, scores * total_effect, neg))
    sc = sc * zrow_ref[...]                      # zero-pad row (ones otherwise)

    ctxn = jnp.einsum('nqk,nkd->nqd', sc, vb,
                      preferred_element_type=f32)                    # (H,S,D)
    ctx = jnp.sum(ctxn * hm, axis=0)             # head "concat" (disjoint lanes)

    attn = jnp.dot(ctx, wo_ref[...].reshape(D, D),
                   preferred_element_type=f32) + bo_ref[...].reshape(1, D)

    # ---- residual + LayerNorm1 -----------------------------------------------
    x = q_cur + attn
    mu = jnp.mean(x, axis=-1, keepdims=True)
    var = jnp.mean(jnp.square(x - mu), axis=-1, keepdims=True)
    hdn = ((x - mu) * jax.lax.rsqrt(var + eps) * g1_ref[...].reshape(1, D)
           + b1_ref[...].reshape(1, D))

    # ---- FFN + residual + LayerNorm2 (discarded when apply_pos=False) --------
    f = jnp.dot(hdn, w1_ref[...].reshape(D, dff),
                preferred_element_type=f32) + fb1_ref[...].reshape(1, dff)
    f = jnp.maximum(f, 0.0)
    f = jnp.dot(f, w2_ref[...].reshape(dff, D),
                preferred_element_type=f32) + fb2_ref[...].reshape(1, D)
    y2 = hdn + f
    mu2 = jnp.mean(y2, axis=-1, keepdims=True)
    var2 = jnp.mean(jnp.square(y2 - mu2), axis=-1, keepdims=True)
    hdn2 = ((y2 - mu2) * jax.lax.rsqrt(var2 + eps) * g2_ref[...].reshape(1, D)
            + b2_ref[...].reshape(1, D))

    result = jnp.where(is_xself, hdn, hdn2).reshape(1, S, D)

    @pl.when(is_y)
    def _():
        y_buf[...] = result

    @pl.when(jnp.logical_not(is_y))
    def _():
        x_buf[...] = result

    # the value left here after the last layer step for this batch element is
    # the final x; output block index is constant across l, so only the final
    # value is written back to HBM.
    o_ref[...] = x_buf[...]


def _arch_pallas(qa, q, st, n1, n_heads):
    B, S, D = qa.shape
    L, _, D2 = st['wkv'].shape
    dff = st['w1'].shape[2]
    H = n_heads

    kernel = partial(_arch_kernel, n_heads=H, n1=n1)

    def wspec(*shp):          # per-layer stacked tensors: index by layer l
        zeros = (0,) * len(shp)
        def imap(b, l):
            return (l,) + zeros
        return pl.BlockSpec((1,) + shp, imap)

    def aspec(*shp):          # per-batch activations: index by batch b
        zeros = (0,) * len(shp)
        def imap(b, l):
            return (b,) + zeros
        return pl.BlockSpec((1,) + shp, imap)

    def cspec(*shp):          # grid-constant tensors
        zeros = (0,) * len(shp)
        def imap(b, l):
            return zeros
        return pl.BlockSpec(shp, imap)

    in_specs = [
        aspec(S, D), aspec(S, D),                        # qa_embed, q_embed
        wspec(D, D2), wspec(1, D2),                      # [wk|wv], [bk|bv]
        wspec(D, D), wspec(1, D),                        # wo, bo
        wspec(1, D), wspec(1, D),                        # ln1 gamma, beta
        wspec(D, dff), wspec(1, dff),                    # ffn w1, b1
        wspec(dff, D), wspec(1, D),                      # ffn w2, b2
        wspec(1, D), wspec(1, D),                        # ln2 gamma, beta
        wspec(H, S, S), wspec(H, S, S), wspec(H, S, S),  # dam, mask*dam, gamma
        wspec(S, S),                                     # zero-pad row mult
        cspec(S, S), cspec(S, S), cspec(H, 1, D),        # cumsum, |i-j|, heads
    ]

    return pl.pallas_call(
        kernel,
        out_shape=jax.ShapeDtypeStruct((B, S, D), jnp.float32),
        grid=(B, L),
        in_specs=in_specs,
        out_specs=pl.BlockSpec((1, S, D), lambda b, l: (b, 0, 0)),
        scratch_shapes=[pltpu.VMEM((1, S, D), jnp.float32),   # y state
                        pltpu.VMEM((1, S, D), jnp.float32)],  # x state
        compiler_params=pltpu.CompilerParams(
            dimension_semantics=("parallel", "arbitrary")),
    )(qa, q,
      st['wkv'], st['bkv'], st['wo'], st['bo'],
      st['ln1_g'], st['ln1_b'], st['w1'], st['b1'], st['w2'], st['b2'],
      st['ln2_g'], st['ln2_b'],
      st['dam'], st['comb'], st['gam'], st['zrow'],
      st['cum'], st['pos'], st['hmask'])


# =============================================================================
# Host-side glue: layer schedule, vectorized DAM, stacked weights, L1 penalty.
# =============================================================================
def _gumbel_channel0(alphas, rng):
    """Forward value of the hard Gumbel-softmax (straight-through), channel 0."""
    expo = jax.random.exponential(rng, alphas.shape, dtype=jnp.float32)
    g = alphas - jnp.log(expo + 1e-5)          # logits + Gumbel noise, tau = 1
    y_soft = jax.nn.softmax(g, axis=-1)
    y_hard = jax.nn.one_hot(jnp.argmax(y_soft, axis=-1), alphas.shape[-1],
                            dtype=jnp.float32)
    return y_hard[..., 0]


def architecture_forward(params, q_embed_data, qa_embed_data, pid_embed_data, rng):
    # emb_type='qid' (no 'pdiff') -> pid_embed_data is unused, as in the reference.
    del pid_embed_data
    B, S, D = q_embed_data.shape

    # static layer schedule (mirrors PyTorch Architecture.forward)
    layer_params, kinds = [], []
    for p in params['blocks_1']:
        layer_params.append(p); kinds.append(0)           # y path
    flag_first = True
    for p in params['blocks_2']:
        layer_params.append(p)
        kinds.append(1 if flag_first else 2)               # x self / x cross
        flag_first = not flag_first
    L = len(layer_params)
    n1 = len(params['blocks_1'])
    H = layer_params[0]['gammas'].shape[0]
    d_k = D // H

    stk = lambda name: jnp.stack([p[name] for p in layer_params], axis=0)

    # stacked per-layer weights; K|V projections fused into one (D, 2D) matmul
    st = {
        'wkv': jnp.concatenate([stk('wk'), stk('wv')], axis=2),
        'bkv': jnp.concatenate([stk('bk'), stk('bv')], axis=2),
        'wo': stk('wo'), 'bo': stk('bo'),
        'ln1_g': stk('ln1_g'), 'ln1_b': stk('ln1_b'),
        'w1': stk('w1'), 'b1': stk('b1'), 'w2': stk('w2'), 'b2': stk('b2'),
        'ln2_g': stk('ln2_g'), 'ln2_b': stk('ln2_b'),
    }

    # vectorized differentiable attention mask (DAM) for all layers at once
    alphas = stk('init_alphas')                              # (L, H, S, 2)
    m_sel = _gumbel_channel0(alphas, rng)                    # (L, H, S)

    r = jnp.arange(S)[:, None]
    c = jnp.arange(S)[None, :]
    d = c - r                                                # (S, S)
    bm = jnp.array([0 if k == 2 else 1 for k in kinds], jnp.int32)
    keep_upper = d[None, :, :] >= bm[:, None, None]          # (L, S, S) triu(k=bm)
    # closed form of the reference triu/rot90/per-row DUS chain:
    #   masks[l,h,i,j] = m_sel[l,h,j-i]  for j-i >= bm, else 0
    masks = jnp.where(keep_upper[:, None], m_sel[:, :, jnp.clip(d, 0, S - 1)], 0.0)
    damf = (masks == 0).astype(jnp.float32)                  # (L, H, S, S)
    maskf = jnp.logical_not(keep_upper).astype(jnp.float32)  # (L, S, S) causal keep
    comb = maskf[:, None] * damf                             # (L, H, S, S)

    gam = jnp.broadcast_to((-jax.nn.softplus(stk('gammas')))[:, :, None, None],
                           (L, H, S, S))
    zp = jnp.array([1.0 if k == 2 else 0.0 for k in kinds], jnp.float32)
    row0 = jnp.broadcast_to(r == 0, (S, S)).astype(jnp.float32)
    zrow = 1.0 - zp[:, None, None] * row0[None]              # (L, S, S)

    st.update(
        dam=damf, comb=comb, gam=gam, zrow=zrow,
        cum=(r <= c).astype(jnp.float32),
        pos=jnp.abs(c - r).astype(jnp.float32),
        hmask=((jnp.arange(D)[None, :] // d_k) ==
               jnp.arange(H)[:, None]).astype(jnp.float32)[:, None, :],
    )

    x_out = _arch_pallas(qa_embed_data, q_embed_data, st, n1, H)

    # L1 penalty: blocks_1 layers and the second layer of each blocks_2 pair
    contrib = jnp.array([0.0 if k == 1 else 1.0 for k in kinds], jnp.float32)
    mask_L1_total = jnp.sum(contrib * jnp.sum(jnp.abs(alphas), axis=(1, 2, 3)))
    return x_out, mask_L1_total


# =============================================================================
# Pure-JAX reference (faithful port of the PyTorch module) for verification.
# =============================================================================
def _layer_norm(x, g, b):
    mu = jnp.mean(x, axis=-1, keepdims=True)
    var = jnp.mean(jnp.square(x - mu), axis=-1, keepdims=True)
    return (x - mu) * jax.lax.rsqrt(var + 1e-5) * g + b


def _generate_dam_ref(m_sel, bmask):
    H, S = m_sel.shape
    mask = jnp.broadcast_to(m_sel[:, :, None], (H, S, S))
    mask = jnp.triu(mask)
    mask = jnp.rot90(mask, 1, axes=(1, 2))
    mask_tri = jnp.zeros((H, S, S), jnp.float32).at[:, 0].set(mask[:, 0])
    for i in range(1, S):
        mask_tri = mask_tri.at[:, i, i:].set(mask[:, i, :S - i])
    masks = mask_tri + jnp.transpose(jnp.triu(mask_tri, 1), (0, 2, 1))
    return jnp.triu(masks, k=bmask)


def _attention_ref(q, k, v, d_k, maskb, damb, zero_pad, gammas):
    scores = jnp.einsum('bhqd,bhkd->bhqk', q, k) / math.sqrt(d_k)
    S = scores.shape[-1]
    x1 = jnp.arange(S)[None, :]
    x2 = jnp.arange(S)[:, None]
    scores_ = jnp.where(damb, scores, -1e32)     # ref bug: mask fill overwritten
    scores_ = jax.nn.softmax(scores_, axis=-1)
    scores_ = scores_ * maskb.astype(jnp.float32) * damb.astype(jnp.float32)
    distcum = jnp.cumsum(scores_, axis=-1)
    disttot = jnp.sum(scores_, axis=-1, keepdims=True)
    pos = jnp.abs(x1 - x2).astype(jnp.float32)[None, None]
    dist = jnp.sqrt(jnp.maximum((disttot - distcum) * pos, 0.0))
    gamma = (-jax.nn.softplus(gammas))[None, :, None, None]
    tot = jnp.clip(jnp.exp(dist * gamma), 1e-5, 1e5)
    scores = jnp.where(maskb, scores * tot, -1e32)
    scores = jnp.where(damb, scores, -1e32)
    scores = jax.nn.softmax(scores, axis=-1)
    if zero_pad:
        scores = scores.at[:, :, 0, :].set(0.0)
    return jnp.einsum('bhqk,bhkd->bhqd', scores, v)


def _layer_ref(p, bmask, query, key, values, apply_pos, m_sel):
    B, S, D = query.shape
    H = p['gammas'].shape[0]
    d_k = D // H
    masks = _generate_dam_ref(m_sel, bmask)
    damb = (masks == 0)[None]
    nopeek = jnp.triu(jnp.ones((S, S), jnp.float32), k=bmask)
    maskb = (nopeek == 0)[None, None]
    zero_pad = (bmask == 0)

    def split_heads(x):
        return x.reshape(B, S, H, d_k).transpose(0, 2, 1, 3)

    k = split_heads(key @ p['wk'] + p['bk'])
    q = split_heads(query @ p['wk'] + p['bk'])              # kq_same
    v = split_heads(values @ p['wv'] + p['bv'])
    out = _attention_ref(q, k, v, d_k, maskb, damb, zero_pad, p['gammas'])
    concat = out.transpose(0, 2, 1, 3).reshape(B, S, D)
    attn = concat @ p['wo'] + p['bo']

    x = _layer_norm(query + attn, p['ln1_g'], p['ln1_b'])
    if apply_pos:
        f = jnp.maximum(x @ p['w1'] + p['b1'], 0.0) @ p['w2'] + p['b2']
        x = _layer_norm(x + f, p['ln2_g'], p['ln2_b'])
    return x


def architecture_forward_ref(params, q_embed_data, qa_embed_data, pid_embed_data, rng):
    del pid_embed_data
    layer_params = list(params['blocks_1']) + list(params['blocks_2'])
    alphas = jnp.stack([p['init_alphas'] for p in layer_params], axis=0)
    m_sel = _gumbel_channel0(alphas, rng)

    y = qa_embed_data
    x = q_embed_data
    total = jnp.float32(0.0)
    li = 0
    for p in params['blocks_1']:
        y = _layer_ref(p, 1, y, y, y, True, m_sel[li])
        total = total + jnp.sum(jnp.abs(p['init_alphas']))
        li += 1
    flag_first = True
    for p in params['blocks_2']:
        if flag_first:
            x = _layer_ref(p, 1, x, x, x, False, m_sel[li])
            flag_first = False
        else:
            x = _layer_ref(p, 0, x, x, y, True, m_sel[li])
            total = total + jnp.sum(jnp.abs(p['init_alphas']))
            flag_first = True
        li += 1
    return x, total


# =============================================================================
# Deterministic parameter init (shapes from the module __init__)
# =============================================================================
def _xavier_uniform(key, shape):
    fan_in, fan_out = shape[0], shape[1]
    limit = math.sqrt(6.0 / (fan_in + fan_out))
    return jax.random.uniform(key, shape, jnp.float32, -limit, limit)


def init_layer_params(key, d_model, d_ff, n_heads, seq_len):
    ks = jax.random.split(key, 8)
    D = d_model
    p = {}
    p['wk'] = _xavier_uniform(ks[0], (D, D))        # stored (in, out): x @ W
    p['bk'] = jnp.zeros((1, D), jnp.float32)        # kq_same=1: wq/bq == wk/bk
    p['wv'] = _xavier_uniform(ks[1], (D, D))
    p['bv'] = jnp.zeros((1, D), jnp.float32)
    p['wo'] = _xavier_uniform(ks[2], (D, D))
    p['bo'] = jnp.zeros((1, D), jnp.float32)
    p['gammas'] = 0.1 * jax.random.normal(ks[3], (n_heads,), jnp.float32)
    p['ln1_g'] = jnp.ones((1, D), jnp.float32)
    p['ln1_b'] = jnp.zeros((1, D), jnp.float32)
    p['w1'] = _xavier_uniform(ks[4], (D, d_ff))
    p['b1'] = jnp.zeros((1, d_ff), jnp.float32)
    p['w2'] = _xavier_uniform(ks[5], (d_ff, D))
    p['b2'] = jnp.zeros((1, D), jnp.float32)
    p['ln2_g'] = jnp.ones((1, D), jnp.float32)
    p['ln2_b'] = jnp.zeros((1, D), jnp.float32)
    p['init_alphas'] = 0.001 * jax.random.normal(
        ks[6], (n_heads, seq_len, 2), jnp.float32)
    return p


# =============================================================================
if __name__ == "__main__":
    # config: n_blocks=1, d_model=32, n_heads=2 (d_feature=16), d_ff=64,
    #         dropout=0.0 (identity), kq_same=1, emb_type='qid', seq_len=8
    B, S, D, H, DFF, NBLOCKS = 2, 8, 32, 2, 64, 1

    root = jax.random.PRNGKey(0)
    kparam, kdata, kdam = jax.random.split(root, 3)

    lkeys = jax.random.split(kparam, 3 * NBLOCKS)
    params = {
        'blocks_1': [init_layer_params(lkeys[i], D, DFF, H, S)
                     for i in range(NBLOCKS)],
        'blocks_2': [init_layer_params(lkeys[NBLOCKS + i], D, DFF, H, S)
                     for i in range(2 * NBLOCKS)],
    }

    kq, kqa, kpid = jax.random.split(kdata, 3)
    q_embed_data = jax.random.normal(kq, (B, S, D), jnp.float32)
    qa_embed_data = jax.random.normal(kqa, (B, S, D), jnp.float32)
    pid_embed_data = jax.random.normal(kpid, (B, S, D), jnp.float32)

    fwd = jax.jit(architecture_forward)
    x_out, mask_l1 = fwd(params, q_embed_data, qa_embed_data,
                         pid_embed_data, kdam)
    jax.block_until_ready((x_out, mask_l1))

    assert x_out.shape == (B, S, D) and x_out.dtype == jnp.float32
    assert bool(jnp.isfinite(x_out).all()) and bool(jnp.isfinite(mask_l1))

    # numeric check against a pure-JAX port faithful to the PyTorch module
    with jax.default_matmul_precision("float32"):
        x_ref, l1_ref = architecture_forward_ref(
            params, q_embed_data, qa_embed_data, pid_embed_data, kdam)
    assert float(jnp.max(jnp.abs(x_out - x_ref))) < 5e-3
    assert abs(float(mask_l1 - l1_ref)) < 1e-3 * (1.0 + abs(float(l1_ref)))

    print("KERNEL_OK")
</pallas_src>

<mosaic_0001>
module attributes {stable_mosaic.version = 11 : i64} {
  func.func @_arch_kernel(%arg0: i32, %arg1: i32, %arg2: memref<1x8x32xf32, #tpu.memory_space<vmem>>, %arg3: memref<1x8x32xf32, #tpu.memory_space<vmem>>, %arg4: memref<1x32x64xf32, #tpu.memory_space<vmem>>, %arg5: memref<1x1x64xf32, #tpu.memory_space<vmem>>, %arg6: memref<1x32x32xf32, #tpu.memory_space<vmem>>, %arg7: memref<1x1x32xf32, #tpu.memory_space<vmem>>, %arg8: memref<1x1x32xf32, #tpu.memory_space<vmem>>, %arg9: memref<1x1x32xf32, #tpu.memory_space<vmem>>, %arg10: memref<1x32x64xf32, #tpu.memory_space<vmem>>, %arg11: memref<1x1x64xf32, #tpu.memory_space<vmem>>, %arg12: memref<1x64x32xf32, #tpu.memory_space<vmem>>, %arg13: memref<1x1x32xf32, #tpu.memory_space<vmem>>, %arg14: memref<1x1x32xf32, #tpu.memory_space<vmem>>, %arg15: memref<1x1x32xf32, #tpu.memory_space<vmem>>, %arg16: memref<1x2x8x8xf32, #tpu.memory_space<vmem>>, %arg17: memref<1x2x8x8xf32, #tpu.memory_space<vmem>>, %arg18: memref<1x2x8x8xf32, #tpu.memory_space<vmem>>, %arg19: memref<1x8x8xf32, #tpu.memory_space<vmem>>, %arg20: memref<8x8xf32, #tpu.memory_space<vmem>>, %arg21: memref<8x8xf32, #tpu.memory_space<vmem>>, %arg22: memref<2x1x32xf32, #tpu.memory_space<vmem>>, %arg23: memref<1x8x32xf32, #tpu.memory_space<vmem>>, %arg24: memref<1x8x32xf32, #tpu.memory_space<vmem>>, %arg25: memref<1x8x32xf32, #tpu.memory_space<vmem>>) attributes {dimension_semantics = [#tpu.dimension_semantics<parallel>, #tpu.dimension_semantics<arbitrary>], iteration_bounds = array<i64: 2, 3>, scalar_prefetch = 0 : i64, scratch_operands = 2 : i64, tpu.core_type = #tpu.core_type<tc>, window_params = [{transform_indices = @transform_0, window_bounds = array<i64: 1, 8, 32>}, {transform_indices = @transform_1, window_bounds = array<i64: 1, 8, 32>}, {transform_indices = @transform_2, window_bounds = array<i64: 1, 32, 64>}, {transform_indices = @transform_3, window_bounds = array<i64: 1, 1, 64>}, {transform_indices = @transform_4, window_bounds = array<i64: 1, 32, 32>}, {transform_indices = @transform_5, window_bounds = array<i64: 1, 1, 32>}, {transform_indices = @transform_6, window_bounds = array<i64: 1, 1, 32>}, {transform_indices = @transform_7, window_bounds = array<i64: 1, 1, 32>}, {transform_indices = @transform_8, window_bounds = array<i64: 1, 32, 64>}, {transform_indices = @transform_9, window_bounds = array<i64: 1, 1, 64>}, {transform_indices = @transform_10, window_bounds = array<i64: 1, 64, 32>}, {transform_indices = @transform_11, window_bounds = array<i64: 1, 1, 32>}, {transform_indices = @transform_12, window_bounds = array<i64: 1, 1, 32>}, {transform_indices = @transform_13, window_bounds = array<i64: 1, 1, 32>}, {transform_indices = @transform_14, window_bounds = array<i64: 1, 2, 8, 8>}, {transform_indices = @transform_15, window_bounds = array<i64: 1, 2, 8, 8>}, {transform_indices = @transform_16, window_bounds = array<i64: 1, 2, 8, 8>}, {transform_indices = @transform_17, window_bounds = array<i64: 1, 8, 8>}, {pipeline_mode = #tpu.pipeline_mode<synchronous>, transform_indices = @transform_18, window_bounds = array<i64: 8, 8>}, {pipeline_mode = #tpu.pipeline_mode<synchronous>, transform_indices = @transform_19, window_bounds = array<i64: 8, 8>}, {pipeline_mode = #tpu.pipeline_mode<synchronous>, transform_indices = @transform_20, window_bounds = array<i64: 2, 1, 32>}, {transform_indices = @transform_21, window_bounds = array<i64: 1, 8, 32>}]} {
    %c0_i32 = arith.constant 0 : i32
    %0 = arith.cmpi eq, %arg1, %c0_i32 : i32
    %1 = arith.extui %0 : i1 to i32
    %c0_i32_0 = arith.constant 0 : i32
    %2 = arith.cmpi ne, %1, %c0_i32_0 : i32
    scf.if %2 {
      %c0_107 = arith.constant 0 : index
      %c0_108 = arith.constant 0 : index
      %c0_109 = arith.constant 0 : index
      %187 = vector.load %arg2[%c0_107, %c0_108, %c0_109] : memref<1x8x32xf32, #tpu.memory_space<vmem>>, vector<1x8x32xf32>
      %c0_110 = arith.constant 0 : index
      %c0_111 = arith.constant 0 : index
      %c0_112 = arith.constant 0 : index
      %188 = vector.load %arg24[%c0_110, %c0_111, %c0_112] : memref<1x8x32xf32, #tpu.memory_space<vmem>>, vector<1x8x32xf32>
      tpu.vector_store %arg24[%c0_110, %c0_111, %c0_112], %187 {strides = array<i32>} : memref<1x8x32xf32, #tpu.memory_space<vmem>>, vector<1x8x32xf32>,
      %c0_113 = arith.constant 0 : index
      %c0_114 = arith.constant 0 : index
      %c0_115 = arith.constant 0 : index
      %189 = vector.load %arg3[%c0_113, %c0_114, %c0_115] : memref<1x8x32xf32, #tpu.memory_space<vmem>>, vector<1x8x32xf32>
      %c0_116 = arith.constant 0 : index
      %c0_117 = arith.constant 0 : index
      %c0_118 = arith.constant 0 : index
      %190 = vector.load %arg25[%c0_116, %c0_117, %c0_118] : memref<1x8x32xf32, #tpu.memory_space<vmem>>, vector<1x8x32xf32>
      tpu.vector_store %arg25[%c0_116, %c0_117, %c0_118], %189 {strides = array<i32>} : memref<1x8x32xf32, #tpu.memory_space<vmem>>, vector<1x8x32xf32>,
    } else {
    }
    %c1_i32 = arith.constant 1 : i32
    %3 = arith.cmpi slt, %arg1, %c1_i32 : i32
    %c1_i32_1 = arith.constant 1 : i32
    %4 = arith.cmpi sge, %arg1, %c1_i32_1 : i32
    %c1_i32_2 = arith.constant 1 : i32
    %5 = arith.subi %arg1, %c1_i32_2 : i32
    %c1_i32_3 = arith.constant 1 : i32
    %6 = arith.andi %5, %c1_i32_3 : i32
    %c0_i32_4 = arith.constant 0 : i32
    %7 = arith.cmpi eq, %6, %c0_i32_4 : i32
    %8 = arith.andi %4, %7 : i1
    %c0 = arith.constant 0 : index
    %c0_5 = arith.constant 0 : index
    %c0_6 = arith.constant 0 : index
    %9 = vector.load %arg24[%c0, %c0_5, %c0_6] : memref<1x8x32xf32, #tpu.memory_space<vmem>>, vector<1x8x32xf32>
    %10 = vector.shape_cast %9 : vector<1x8x32xf32> to vector<8x32xf32>
    %c0_7 = arith.constant 0 : index
    %c0_8 = arith.constant 0 : index
    %c0_9 = arith.constant 0 : index
    %11 = vector.load %arg25[%c0_7, %c0_8, %c0_9] : memref<1x8x32xf32, #tpu.memory_space<vmem>>, vector<1x8x32xf32>
    %12 = vector.shape_cast %11 : vector<1x8x32xf32> to vector<8x32xf32>
    %13 = arith.select %3, %10, %12 : vector<8x32xf32>
    %14 = arith.select %8, %12, %10 : vector<8x32xf32>
    %15 = tpu.concatenate %13, %14 in 0 : vector<8x32xf32>, vector<8x32xf32> -> vector<16x32xf32>
    %c0_10 = arith.constant 0 : index
    %c0_11 = arith.constant 0 : index
    %c0_12 = arith.constant 0 : index
    %16 = vector.load %arg4[%c0_10, %c0_11, %c0_12] : memref<1x32x64xf32, #tpu.memory_space<vmem>>, vector<1x32x64xf32>
    %17 = vector.shape_cast %16 : vector<1x32x64xf32> to vector<32x64xf32>
    %cst = arith.constant dense<0.000000e+00> : vector<16x64xf32>
    %18 = tpu.matmul %15, %17, %cst {dimension_numbers = #tpu.dot_dimension_numbers<[1], [0], [0], [1], [0, 0, 1, 1], [], []>} : vector<16x32xf32>, vector<32x64xf32>, vector<16x64xf32> -> vector<16x64xf32>
    %c0_13 = arith.constant 0 : index
    %c0_14 = arith.constant 0 : index
    %c0_15 = arith.constant 0 : index
    %19 = vector.load %arg5[%c0_13, %c0_14, %c0_15] : memref<1x1x64xf32, #tpu.memory_space<vmem>>, vector<1x1x64xf32>
    %20 = vector.shape_cast %19 : vector<1x1x64xf32> to vector<1x64xf32>
    %21 = vector.broadcast %20 : vector<1x64xf32> to vector<16x64xf32>
    %22 = arith.addf %18, %21 : vector<16x64xf32>
    %23 = vector.extract_strided_slice %22 {offsets = [0, 0], sizes = [8, 32], strides = [1, 1]} : vector<16x64xf32> to vector<8x32xf32>
    %24 = vector.extract_strided_slice %22 {offsets = [8, 32], sizes = [8, 32], strides = [1, 1]} : vector<16x64xf32> to vector<8x32xf32>
    %c0_16 = arith.constant 0 : index
    %c0_17 = arith.constant 0 : index
    %c0_18 = arith.constant 0 : index
    %25 = vector.load %arg22[%c0_16, %c0_17, %c0_18] : memref<2x1x32xf32, #tpu.memory_space<vmem>>, vector<2x1x32xf32>
    %26 = vector.shape_cast %23 : vector<8x32xf32> to vector<1x8x32xf32>
    %27 = vector.broadcast %26 : vector<1x8x32xf32> to vector<2x8x32xf32>
    %28 = vector.broadcast %25 : vector<2x1x32xf32> to vector<2x8x32xf32>
    %29 = arith.mulf %27, %28 : vector<2x8x32xf32>
    %30 = vector.shape_cast %23 : vector<8x32xf32> to vector<1x8x32xf32>
    %31 = vector.shape_cast %30 : vector<1x8x32xf32> to vector<1x8x32xf32>
    %32 = vector.broadcast %31 : vector<1x8x32xf32> to vector<2x8x32xf32>
    %33 = vector.shape_cast %24 : vector<8x32xf32> to vector<1x8x32xf32>
    %34 = vector.shape_cast %33 : vector<1x8x32xf32> to vector<1x8x32xf32>
    %35 = vector.broadcast %34 : vector<1x8x32xf32> to vector<2x8x32xf32>
    "tpu.trace_start"() <{level = 10 : i32, message = "nqd,nkd->nqk"}> : () -> ()
    %cst_19 = arith.constant dense<0.000000e+00> : vector<2x8x8xf32>
    %36 = tpu.matmul %29, %32, %cst_19 {dimension_numbers = #tpu.dot_dimension_numbers<[2], [2], [1], [1], [0, 0, 0, 1, 1, 1], [0], [0]>} : vector<2x8x32xf32>, vector<2x8x32xf32>, vector<2x8x8xf32> -> vector<2x8x8xf32>
    "tpu.trace_stop"() : () -> ()
    %cst_20 = arith.constant 2.500000e-01 : f32
    %37 = vector.broadcast %cst_20 : f32 to vector<2x8x8xf32>
    %38 = arith.mulf %36, %37 : vector<2x8x8xf32>
    %c0_21 = arith.constant 0 : index
    %c0_22 = arith.constant 0 : index
    %c0_23 = arith.constant 0 : index
    %c0_24 = arith.constant 0 : index
    %39 = vector.load %arg16[%c0_21, %c0_22, %c0_23, %c0_24] : memref<1x2x8x8xf32, #tpu.memory_space<vmem>>, vector<1x2x8x8xf32>
    %40 = vector.shape_cast %39 : vector<1x2x8x8xf32> to vector<2x8x8xf32>
    %c0_25 = arith.constant 0 : index
    %c0_26 = arith.constant 0 : index
    %c0_27 = arith.constant 0 : index
    %c0_28 = arith.constant 0 : index
    %41 = vector.load %arg17[%c0_25, %c0_26, %c0_27, %c0_28] : memref<1x2x8x8xf32, #tpu.memory_space<vmem>>, vector<1x2x8x8xf32>
    %42 = vector.shape_cast %41 : vector<1x2x8x8xf32> to vector<2x8x8xf32>
    %c0_29 = arith.constant 0 : index
    %c0_30 = arith.constant 0 : index
    %c0_31 = arith.constant 0 : index
    %c0_32 = arith.constant 0 : index
    %43 = vector.load %arg18[%c0_29, %c0_30, %c0_31, %c0_32] : memref<1x2x8x8xf32, #tpu.memory_space<vmem>>, vector<1x2x8x8xf32>
    %44 = vector.shape_cast %43 : vector<1x2x8x8xf32> to vector<2x8x8xf32>
    %c0_33 = arith.constant 0 : index
    %c0_34 = arith.constant 0 : index
    %45 = vector.load %arg20[%c0_33, %c0_34] : memref<8x8xf32, #tpu.memory_space<vmem>>, vector<8x8xf32>
    %c0_35 = arith.constant 0 : index
    %c0_36 = arith.constant 0 : index
    %46 = vector.load %arg21[%c0_35, %c0_36] : memref<8x8xf32, #tpu.memory_space<vmem>>, vector<8x8xf32>
    %cst_37 = arith.constant 0.000000e+00 : f32
    %47 = vector.broadcast %cst_37 : f32 to vector<2x8x8xf32>
    %48 = arith.cmpf ogt, %40, %47 : vector<2x8x8xf32>
    %cst_38 = arith.constant -1.000000e+32 : f32
    %49 = vector.broadcast %cst_38 : f32 to vector<2x8x8xf32>
    %50 = arith.select %48, %38, %49 : vector<2x8x8xi1>, vector<2x8x8xf32>
    %cst_39 = arith.constant dense<0xFF800000> : vector<2x8xf32>
    %51 = vector.multi_reduction <maximumf>, %50, %cst_39 [2] : vector<2x8x8xf32> to vector<2x8xf32>
    %52 = vector.shape_cast %51 : vector<2x8xf32> to vector<2x8x1xf32>
    %53 = vector.broadcast %52 : vector<2x8x1xf32> to vector<2x8x8xf32>
    %54 = arith.subf %50, %53 : vector<2x8x8xf32>
    %55 = math.exp %54 : vector<2x8x8xf32>
    %cst_40 = arith.constant dense<0.000000e+00> : vector<2x8xf32>
    %56 = vector.multi_reduction <add>, %55, %cst_40 [2] : vector<2x8x8xf32> to vector<2x8xf32>
    %57 = vector.shape_cast %56 : vector<2x8xf32> to vector<2x8x1xf32>
    %58 = vector.broadcast %57 : vector<2x8x1xf32> to vector<2x8x8xf32>
    %59 = arith.divf %55, %58 : vector<2x8x8xf32>
    %60 = arith.mulf %59, %42 : vector<2x8x8xf32>
    %61 = vector.shape_cast %60 : vector<2x8x8xf32> to vector<16x8xf32>
    %cst_41 = arith.constant dense<0.000000e+00> : vector<16x8xf32>
    %62 = tpu.matmul %61, %45, %cst_41 {dimension_numbers = #tpu.dot_dimension_numbers<[1], [0], [0], [1], [0, 0, 1, 1], [], []>} : vector<16x8xf32>, vector<8x8xf32>, vector<16x8xf32> -> vector<16x8xf32>
    %63 = vector.shape_cast %62 : vector<16x8xf32> to vector<2x8x8xf32>
    %cst_42 = arith.constant dense<0.000000e+00> : vector<2x8xf32>
    %64 = vector.multi_reduction <add>, %60, %cst_42 [2] : vector<2x8x8xf32> to vector<2x8xf32>
    %65 = vector.shape_cast %64 : vector<2x8xf32> to vector<2x8x1xf32>
    %66 = vector.broadcast %65 : vector<2x8x1xf32> to vector<2x8x8xf32>
    %67 = arith.subf %66, %63 : vector<2x8x8xf32>
    %68 = vector.shape_cast %46 : vector<8x8xf32> to vector<1x8x8xf32>
    %69 = vector.broadcast %68 : vector<1x8x8xf32> to vector<2x8x8xf32>
    %70 = arith.mulf %67, %69 : vector<2x8x8xf32>
    %cst_43 = arith.constant 0.000000e+00 : f32
    %71 = vector.broadcast %cst_43 : f32 to vector<2x8x8xf32>
    %72 = arith.maximumf %70, %71 : vector<2x8x8xf32>
    %73 = math.sqrt %72 : vector<2x8x8xf32>
    %74 = arith.mulf %73, %44 : vector<2x8x8xf32>
    %75 = math.exp %74 : vector<2x8x8xf32>
    %cst_44 = arith.constant 9.99999974E-6 : f32
    %cst_45 = arith.constant 1.000000e+05 : f32
    %76 = vector.broadcast %cst_44 : f32 to vector<2x8x8xf32>
    %77 = arith.maximumf %76, %75 : vector<2x8x8xf32>
    %78 = vector.broadcast %cst_45 : f32 to vector<2x8x8xf32>
    %79 = arith.minimumf %78, %77 : vector<2x8x8xf32>
    %cst_46 = arith.constant 0.000000e+00 : f32
    %80 = vector.broadcast %cst_46 : f32 to vector<2x8x8xf32>
    %81 = arith.cmpf ogt, %42, %80 : vector<2x8x8xf32>
    %82 = arith.mulf %38, %79 : vector<2x8x8xf32>
    %cst_47 = arith.constant -1.000000e+32 : f32
    %83 = vector.broadcast %cst_47 : f32 to vector<2x8x8xf32>
    %84 = arith.select %81, %82, %83 : vector<2x8x8xi1>, vector<2x8x8xf32>
    %cst_48 = arith.constant dense<0xFF800000> : vector<2x8xf32>
    %85 = vector.multi_reduction <maximumf>, %84, %cst_48 [2] : vector<2x8x8xf32> to vector<2x8xf32>
    %86 = vector.shape_cast %85 : vector<2x8xf32> to vector<2x8x1xf32>
    %87 = vector.broadcast %86 : vector<2x8x1xf32> to vector<2x8x8xf32>
    %88 = arith.subf %84, %87 : vector<2x8x8xf32>
    %89 = math.exp %88 : vector<2x8x8xf32>
    %cst_49 = arith.constant dense<0.000000e+00> : vector<2x8xf32>
    %90 = vector.multi_reduction <add>, %89, %cst_49 [2] : vector<2x8x8xf32> to vector<2x8xf32>
    %91 = vector.shape_cast %90 : vector<2x8xf32> to vector<2x8x1xf32>
    %92 = vector.broadcast %91 : vector<2x8x1xf32> to vector<2x8x8xf32>
    %93 = arith.divf %89, %92 : vector<2x8x8xf32>
    %c0_50 = arith.constant 0 : index
    %c0_51 = arith.constant 0 : index
    %c0_52 = arith.constant 0 : index
    %94 = vector.load %arg19[%c0_50, %c0_51, %c0_52] : memref<1x8x8xf32, #tpu.memory_space<vmem>>, vector<1x8x8xf32>
    %95 = vector.broadcast %94 : vector<1x8x8xf32> to vector<2x8x8xf32>
    %96 = arith.mulf %93, %95 : vector<2x8x8xf32>
    "tpu.trace_start"() <{level = 10 : i32, message = "nqk,nkd->nqd"}> : () -> ()
    %cst_53 = arith.constant dense<0.000000e+00> : vector<2x8x32xf32>
    %97 = tpu.matmul %96, %35, %cst_53 {dimension_numbers = #tpu.dot_dimension_numbers<[2], [1], [1], [2], [0, 0, 0, 1, 1, 2], [0], [0]>} : vector<2x8x8xf32>, vector<2x8x32xf32>, vector<2x8x32xf32> -> vector<2x8x32xf32>
    "tpu.trace_stop"() : () -> ()
    %98 = vector.broadcast %25 : vector<2x1x32xf32> to vector<2x8x32xf32>
    %99 = arith.mulf %97, %98 : vector<2x8x32xf32>
    %cst_54 = arith.constant dense<0.000000e+00> : vector<8x32xf32>
    %100 = vector.multi_reduction <add>, %99, %cst_54 [0] : vector<2x8x32xf32> to vector<8x32xf32>
    %c0_55 = arith.constant 0 : index
    %c0_56 = arith.constant 0 : index
    %c0_57 = arith.constant 0 : index
    %101 = vector.load %arg6[%c0_55, %c0_56, %c0_57] : memref<1x32x32xf32, #tpu.memory_space<vmem>>, vector<1x32x32xf32>
    %102 = vector.shape_cast %101 : vector<1x32x32xf32> to vector<32x32xf32>
    %cst_58 = arith.constant dense<0.000000e+00> : vector<8x32xf32>
    %103 = tpu.matmul %100, %102, %cst_58 {dimension_numbers = #tpu.dot_dimension_numbers<[1], [0], [0], [1], [0, 0, 1, 1], [], []>} : vector<8x32xf32>, vector<32x32xf32>, vector<8x32xf32> -> vector<8x32xf32>
    %c0_59 = arith.constant 0 : index
    %c0_60 = arith.constant 0 : index
    %c0_61 = arith.constant 0 : index
    %104 = vector.load %arg7[%c0_59, %c0_60, %c0_61] : memref<1x1x32xf32, #tpu.memory_space<vmem>>, vector<1x1x32xf32>
    %105 = vector.shape_cast %104 : vector<1x1x32xf32> to vector<1x32xf32>
    %106 = vector.broadcast %105 : vector<1x32xf32> to vector<8x32xf32>
    %107 = arith.addf %103, %106 : vector<8x32xf32>
    %108 = arith.addf %13, %107 : vector<8x32xf32>
    %cst_62 = arith.constant dense<0.000000e+00> : vector<8xf32>
    %109 = vector.multi_reduction <add>, %108, %cst_62 [1] : vector<8x32xf32> to vector<8xf32>
    %110 = vector.shape_cast %109 : vector<8xf32> to vector<8x1xf32>
    %cst_63 = arith.constant 3.200000e+01 : f32
    %111 = vector.broadcast %cst_63 : f32 to vector<8x1xf32>
    %112 = arith.divf %110, %111 : vector<8x1xf32>
    %113 = vector.broadcast %112 : vector<8x1xf32> to vector<8x32xf32>
    %114 = arith.subf %108, %113 : vector<8x32xf32>
    %115 = arith.mulf %114, %114 : vector<8x32xf32>
    %cst_64 = arith.constant dense<0.000000e+00> : vector<8xf32>
    %116 = vector.multi_reduction <add>, %115, %cst_64 [1] : vector<8x32xf32> to vector<8xf32>
    %117 = vector.shape_cast %116 : vector<8xf32> to vector<8x1xf32>
    %cst_65 = arith.constant 3.200000e+01 : f32
    %118 = vector.broadcast %cst_65 : f32 to vector<8x1xf32>
    %119 = arith.divf %117, %118 : vector<8x1xf32>
    %120 = vector.broadcast %112 : vector<8x1xf32> to vector<8x32xf32>
    %121 = arith.subf %108, %120 : vector<8x32xf32>
    %cst_66 = arith.constant 9.99999974E-6 : f32
    %122 = vector.broadcast %cst_66 : f32 to vector<8x1xf32>
    %123 = arith.addf %119, %122 : vector<8x1xf32>
    %124 = math.rsqrt %123 : vector<8x1xf32>
    %125 = vector.broadcast %124 : vector<8x1xf32> to vector<8x32xf32>
    %126 = arith.mulf %121, %125 : vector<8x32xf32>
    %c0_67 = arith.constant 0 : index
    %c0_68 = arith.constant 0 : index
    %c0_69 = arith.constant 0 : index
    %127 = vector.load %arg8[%c0_67, %c0_68, %c0_69] : memref<1x1x32xf32, #tpu.memory_space<vmem>>, vector<1x1x32xf32>
    %128 = vector.shape_cast %127 : vector<1x1x32xf32> to vector<1x32xf32>
    %129 = vector.broadcast %128 : vector<1x32xf32> to vector<8x32xf32>
    %130 = arith.mulf %126, %129 : vector<8x32xf32>
    %c0_70 = arith.constant 0 : index
    %c0_71 = arith.constant 0 : index
    %c0_72 = arith.constant 0 : index
    %131 = vector.load %arg9[%c0_70, %c0_71, %c0_72] : memref<1x1x32xf32, #tpu.memory_space<vmem>>, vector<1x1x32xf32>
    %132 = vector.shape_cast %131 : vector<1x1x32xf32> to vector<1x32xf32>
    %133 = vector.broadcast %132 : vector<1x32xf32> to vector<8x32xf32>
    %134 = arith.addf %130, %133 : vector<8x32xf32>
    %c0_73 = arith.constant 0 : index
    %c0_74 = arith.constant 0 : index
    %c0_75 = arith.constant 0 : index
    %135 = vector.load %arg10[%c0_73, %c0_74, %c0_75] : memref<1x32x64xf32, #tpu.memory_space<vmem>>, vector<1x32x64xf32>
    %136 = vector.shape_cast %135 : vector<1x32x64xf32> to vector<32x64xf32>
    %cst_76 = arith.constant dense<0.000000e+00> : vector<8x64xf32>
    %137 = tpu.matmul %134, %136, %cst_76 {dimension_numbers = #tpu.dot_dimension_numbers<[1], [0], [0], [1], [0, 0, 1, 1], [], []>} : vector<8x32xf32>, vector<32x64xf32>, vector<8x64xf32> -> vector<8x64xf32>
    %c0_77 = arith.constant 0 : index
    %c0_78 = arith.constant 0 : index
    %c0_79 = arith.constant 0 : index
    %138 = vector.load %arg11[%c0_77, %c0_78, %c0_79] : memref<1x1x64xf32, #tpu.memory_space<vmem>>, vector<1x1x64xf32>
    %139 = vector.shape_cast %138 : vector<1x1x64xf32> to vector<1x64xf32>
    %140 = vector.broadcast %139 : vector<1x64xf32> to vector<8x64xf32>
    %141 = arith.addf %137, %140 : vector<8x64xf32>
    %cst_80 = arith.constant 0.000000e+00 : f32
    %142 = vector.broadcast %cst_80 : f32 to vector<8x64xf32>
    %143 = arith.maximumf %141, %142 : vector<8x64xf32>
    %c0_81 = arith.constant 0 : index
    %c0_82 = arith.constant 0 : index
    %c0_83 = arith.constant 0 : index
    %144 = vector.load %arg12[%c0_81, %c0_82, %c0_83] : memref<1x64x32xf32, #tpu.memory_space<vmem>>, vector<1x64x32xf32>
    %145 = vector.shape_cast %144 : vector<1x64x32xf32> to vector<64x32xf32>
    %cst_84 = arith.constant dense<0.000000e+00> : vector<8x32xf32>
    %146 = tpu.matmul %143, %145, %cst_84 {dimension_numbers = #tpu.dot_dimension_numbers<[1], [0], [0], [1], [0, 0, 1, 1], [], []>} : vector<8x64xf32>, vector<64x32xf32>, vector<8x32xf32> -> vector<8x32xf32>
    %c0_85 = arith.constant 0 : index
    %c0_86 = arith.constant 0 : index
    %c0_87 = arith.constant 0 : index
    %147 = vector.load %arg13[%c0_85, %c0_86, %c0_87] : memref<1x1x32xf32, #tpu.memory_space<vmem>>, vector<1x1x32xf32>
    %148 = vector.shape_cast %147 : vector<1x1x32xf32> to vector<1x32xf32>
    %149 = vector.broadcast %148 : vector<1x32xf32> to vector<8x32xf32>
    %150 = arith.addf %146, %149 : vector<8x32xf32>
    %151 = arith.addf %134, %150 : vector<8x32xf32>
    %cst_88 = arith.constant dense<0.000000e+00> : vector<8xf32>
    %152 = vector.multi_reduction <add>, %151, %cst_88 [1] : vector<8x32xf32> to vector<8xf32>
    %153 = vector.shape_cast %152 : vector<8xf32> to vector<8x1xf32>
    %cst_89 = arith.constant 3.200000e+01 : f32
    %154 = vector.broadcast %cst_89 : f32 to vector<8x1xf32>
    %155 = arith.divf %153, %154 : vector<8x1xf32>
    %156 = vector.broadcast %155 : vector<8x1xf32> to vector<8x32xf32>
    %157 = arith.subf %151, %156 : vector<8x32xf32>
    %158 = arith.mulf %157, %157 : vector<8x32xf32>
    %cst_90 = arith.constant dense<0.000000e+00> : vector<8xf32>
    %159 = vector.multi_reduction <add>, %158, %cst_90 [1] : vector<8x32xf32> to vector<8xf32>
    %160 = vector.shape_cast %159 : vector<8xf32> to vector<8x1xf32>
    %cst_91 = arith.constant 3.200000e+01 : f32
    %161 = vector.broadcast %cst_91 : f32 to vector<8x1xf32>
    %162 = arith.divf %160, %161 : vector<8x1xf32>
    %163 = vector.broadcast %155 : vector<8x1xf32> to vector<8x32xf32>
    %164 = arith.subf %151, %163 : vector<8x32xf32>
    %cst_92 = arith.constant 9.99999974E-6 : f32
    %165 = vector.broadcast %cst_92 : f32 to vector<8x1xf32>
    %166 = arith.addf %162, %165 : vector<8x1xf32>
    %167 = math.rsqrt %166 : vector<8x1xf32>
    %168 = vector.broadcast %167 : vector<8x1xf32> to vector<8x32xf32>
    %169 = arith.mulf %164, %168 : vector<8x32xf32>
    %c0_93 = arith.constant 0 : index
    %c0_94 = arith.constant 0 : index
    %c0_95 = arith.constant 0 : index
    %170 = vector.load %arg14[%c0_93, %c0_94, %c0_95] : memref<1x1x32xf32, #tpu.memory_space<vmem>>, vector<1x1x32xf32>
    %171 = vector.shape_cast %170 : vector<1x1x32xf32> to vector<1x32xf32>
    %172 = vector.broadcast %171 : vector<1x32xf32> to vector<8x32xf32>
    %173 = arith.mulf %169, %172 : vector<8x32xf32>
    %c0_96 = arith.constant 0 : index
    %c0_97 = arith.constant 0 : index
    %c0_98 = arith.constant 0 : index
    %174 = vector.load %arg15[%c0_96, %c0_97, %c0_98] : memref<1x1x32xf32, #tpu.memory_space<vmem>>, vector<1x1x32xf32>
    %175 = vector.shape_cast %174 : vector<1x1x32xf32> to vector<1x32xf32>
    %176 = vector.broadcast %175 : vector<1x32xf32> to vector<8x32xf32>
    %177 = arith.addf %173, %176 : vector<8x32xf32>
    %178 = arith.select %8, %134, %177 : vector<8x32xf32>
    %179 = vector.shape_cast %178 : vector<8x32xf32> to vector<1x8x32xf32>
    %180 = arith.extui %3 : i1 to i32
    %c0_i32_99 = arith.constant 0 : i32
    %181 = arith.cmpi ne, %180, %c0_i32_99 : i32
    scf.if %181 {
      %c0_107 = arith.constant 0 : index
      %c0_108 = arith.constant 0 : index
      %c0_109 = arith.constant 0 : index
      %187 = vector.load %arg24[%c0_107, %c0_108, %c0_109] : memref<1x8x32xf32, #tpu.memory_space<vmem>>, vector<1x8x32xf32>
      tpu.vector_store %arg24[%c0_107, %c0_108, %c0_109], %179 {strides = array<i32>} : memref<1x8x32xf32, #tpu.memory_space<vmem>>, vector<1x8x32xf32>,
    } else {
    }
    %true = arith.constant true
    %182 = arith.xori %3, %true : i1
    %183 = arith.extui %182 : i1 to i32
    %c0_i32_100 = arith.constant 0 : i32
    %184 = arith.cmpi ne, %183, %c0_i32_100 : i32
    scf.if %184 {
      %c0_107 = arith.constant 0 : index
      %c0_108 = arith.constant 0 : index
      %c0_109 = arith.constant 0 : index
      %187 = vector.load %arg25[%c0_107, %c0_108, %c0_109] : memref<1x8x32xf32, #tpu.memory_space<vmem>>, vector<1x8x32xf32>
      tpu.vector_store %arg25[%c0_107, %c0_108, %c0_109], %179 {strides = array<i32>} : memref<1x8x32xf32, #tpu.memory_space<vmem>>, vector<1x8x32xf32>,
    } else {
    }
    %c0_101 = arith.constant 0 : index
    %c0_102 = arith.constant 0 : index
    %c0_103 = arith.constant 0 : index
    %185 = vector.load %arg25[%c0_101, %c0_102, %c0_103] : memref<1x8x32xf32, #tpu.memory_space<vmem>>, vector<1x8x32xf32>
    %c0_104 = arith.constant 0 : index
    %c0_105 = arith.constant 0 : index
    %c0_106 = arith.constant 0 : index
    %186 = vector.load %arg23[%c0_104, %c0_105, %c0_106] : memref<1x8x32xf32, #tpu.memory_space<vmem>>, vector<1x8x32xf32>
    tpu.vector_store %arg23[%c0_104, %c0_105, %c0_106], %185 {strides = array<i32>} : memref<1x8x32xf32, #tpu.memory_space<vmem>>, vector<1x8x32xf32>,
    return
  }
  func.func @transform_0(%arg0: i32, %arg1: i32) -> (i32, i32, i32) {
    %c0_i32 = arith.constant 0 : i32
    %c0_i32_0 = arith.constant 0 : i32
    %c0_i32_1 = arith.constant 0 : i32
    return %arg0, %c0_i32, %c0_i32_0 : i32, i32, i32
  }
  func.func @transform_1(%arg0: i32, %arg1: i32) -> (i32, i32, i32) {
    %c0_i32 = arith.constant 0 : i32
    %c0_i32_0 = arith.constant 0 : i32
    %c0_i32_1 = arith.constant 0 : i32
    return %arg0, %c0_i32, %c0_i32_0 : i32, i32, i32
  }
  func.func @transform_2(%arg0: i32, %arg1: i32) -> (i32, i32, i32) {
    %c0_i32 = arith.constant 0 : i32
    %c0_i32_0 = arith.constant 0 : i32
    %c0_i32_1 = arith.constant 0 : i32
    return %arg1, %c0_i32, %c0_i32_0 : i32, i32, i32
  }
  func.func @transform_3(%arg0: i32, %arg1: i32) -> (i32, i32, i32) {
    %c0_i32 = arith.constant 0 : i32
    %c0_i32_0 = arith.constant 0 : i32
    %c0_i32_1 = arith.constant 0 : i32
    return %arg1, %c0_i32, %c0_i32_0 : i32, i32, i32
  }
  func.func @transform_4(%arg0: i32, %arg1: i32) -> (i32, i32, i32) {
    %c0_i32 = arith.constant 0 : i32
    %c0_i32_0 = arith.constant 0 : i32
    %c0_i32_1 = arith.constant 0 : i32
    return %arg1, %c0_i32, %c0_i32_0 : i32, i32, i32
  }
  func.func @transform_5(%arg0: i32, %arg1: i32) -> (i32, i32, i32) {
    %c0_i32 = arith.constant 0 : i32
    %c0_i32_0 = arith.constant 0 : i32
    %c0_i32_1 = arith.constant 0 : i32
    return %arg1, %c0_i32, %c0_i32_0 : i32, i32, i32
  }
  func.func @transform_6(%arg0: i32, %arg1: i32) -> (i32, i32, i32) {
    %c0_i32 = arith.constant 0 : i32
    %c0_i32_0 = arith.constant 0 : i32
    %c0_i32_1 = arith.constant 0 : i32
    return %arg1, %c0_i32, %c0_i32_0 : i32, i32, i32
  }
  func.func @transform_7(%arg0: i32, %arg1: i32) -> (i32, i32, i32) {
    %c0_i32 = arith.constant 0 : i32
    %c0_i32_0 = arith.constant 0 : i32
    %c0_i32_1 = arith.constant 0 : i32
    return %arg1, %c0_i32, %c0_i32_0 : i32, i32, i32
  }
  func.func @transform_8(%arg0: i32, %arg1: i32) -> (i32, i32, i32) {
    %c0_i32 = arith.constant 0 : i32
    %c0_i32_0 = arith.constant 0 : i32
    %c0_i32_1 = arith.constant 0 : i32
    return %arg1, %c0_i32, %c0_i32_0 : i32, i32, i32
  }
  func.func @transform_9(%arg0: i32, %arg1: i32) -> (i32, i32, i32) {
    %c0_i32 = arith.constant 0 : i32
    %c0_i32_0 = arith.constant 0 : i32
    %c0_i32_1 = arith.constant 0 : i32
    return %arg1, %c0_i32, %c0_i32_0 : i32, i32, i32
  }
  func.func @transform_10(%arg0: i32, %arg1: i32) -> (i32, i32, i32) {
    %c0_i32 = arith.constant 0 : i32
    %c0_i32_0 = arith.constant 0 : i32
    %c0_i32_1 = arith.constant 0 : i32
    return %arg1, %c0_i32, %c0_i32_0 : i32, i32, i32
  }
  func.func @transform_11(%arg0: i32, %arg1: i32) -> (i32, i32, i32) {
    %c0_i32 = arith.constant 0 : i32
    %c0_i32_0 = arith.constant 0 : i32
    %c0_i32_1 = arith.constant 0 : i32
    return %arg1, %c0_i32, %c0_i32_0 : i32, i32, i32
  }
  func.func @transform_12(%arg0: i32, %arg1: i32) -> (i32, i32, i32) {
    %c0_i32 = arith.constant 0 : i32
    %c0_i32_0 = arith.constant 0 : i32
    %c0_i32_1 = arith.constant 0 : i32
    return %arg1, %c0_i32, %c0_i32_0 : i32, i32, i32
  }
  func.func @transform_13(%arg0: i32, %arg1: i32) -> (i32, i32, i32) {
    %c0_i32 = arith.constant 0 : i32
    %c0_i32_0 = arith.constant 0 : i32
    %c0_i32_1 = arith.constant 0 : i32
    return %arg1, %c0_i32, %c0_i32_0 : i32, i32, i32
  }
  func.func @transform_14(%arg0: i32, %arg1: i32) -> (i32, i32, i32, i32) {
    %c0_i32 = arith.constant 0 : i32
    %c0_i32_0 = arith.constant 0 : i32
    %c0_i32_1 = arith.constant 0 : i32
    %c0_i32_2 = arith.constant 0 : i32
    return %arg1, %c0_i32, %c0_i32_0, %c0_i32_1 : i32, i32, i32, i32
  }
  func.func @transform_15(%arg0: i32, %arg1: i32) -> (i32, i32, i32, i32) {
    %c0_i32 = arith.constant 0 : i32
    %c0_i32_0 = arith.constant 0 : i32
    %c0_i32_1 = arith.constant 0 : i32
    %c0_i32_2 = arith.constant 0 : i32
    return %arg1, %c0_i32, %c0_i32_0, %c0_i32_1 : i32, i32, i32, i32
  }
  func.func @transform_16(%arg0: i32, %arg1: i32) -> (i32, i32, i32, i32) {
    %c0_i32 = arith.constant 0 : i32
    %c0_i32_0 = arith.constant 0 : i32
    %c0_i32_1 = arith.constant 0 : i32
    %c0_i32_2 = arith.constant 0 : i32
    return %arg1, %c0_i32, %c0_i32_0, %c0_i32_1 : i32, i32, i32, i32
  }
  func.func @transform_17(%arg0: i32, %arg1: i32) -> (i32, i32, i32) {
    %c0_i32 = arith.constant 0 : i32
    %c0_i32_0 = arith.constant 0 : i32
    %c0_i32_1 = arith.constant 0 : i32
    return %arg1, %c0_i32, %c0_i32_0 : i32, i32, i32
  }
  func.func @transform_18(%arg0: i32, %arg1: i32) -> (i32, i32) {
    %c0_i32 = arith.constant 0 : i32
    %c0_i32_0 = arith.constant 0 : i32
    %c0_i32_1 = arith.constant 0 : i32
    return %c0_i32, %c0_i32_0 : i32, i32
  }
  func.func @transform_19(%arg0: i32, %arg1: i32) -> (i32, i32) {
    %c0_i32 = arith.constant 0 : i32
    %c0_i32_0 = arith.constant 0 : i32
    %c0_i32_1 = arith.constant 0 : i32
    return %c0_i32, %c0_i32_0 : i32, i32
  }
  func.func @transform_20(%arg0: i32, %arg1: i32) -> (i32, i32, i32) {
    %c0_i32 = arith.constant 0 : i32
    %c0_i32_0 = arith.constant 0 : i32
    %c0_i32_1 = arith.constant 0 : i32
    %c0_i32_2 = arith.constant 0 : i32
    return %c0_i32, %c0_i32_0, %c0_i32_1 : i32, i32, i32
  }
  func.func @transform_21(%arg0: i32, %arg1: i32) -> (i32, i32, i32) {
    %c0_i32 = arith.constant 0 : i32
    %c0_i32_0 = arith.constant 0 : i32
    %c0_i32_1 = arith.constant 0 : i32
    return %arg0, %c0_i32, %c0_i32_0 : i32, i32, i32
  }
}

</mosaic_0001>

<llo_original>
// kernel: architecture_forward.1
$region0: #{architecture_forward.1}
  #allocation0 [shape = 'u32[]', space=smem, size = 0x4, offset = 0x4, fixed_abs, tag = 'smem constant byte address 0x4 - core index']
  #allocation1 [shape = 'u32[72,128]{1,0:T(1,128)}', space=vmem, size = 0x9000, scoped, tag = 'internal scratch']
  #allocation2 [shape = 'f32[1,8,32]{2,1,0:T(8,128)}', space=vmem, size = 0x1000, scoped, tag = 'scratch operand']
  #allocation3 [shape = 'f32[1,8,32]{2,1,0:T(8,128)}', space=vmem, size = 0x1000, scoped, tag = 'scratch operand']
  %s0 = inlined_call_operand.vmem [shape: f32[2,8,32], index: 0, kind: input, shape index: {}]
  %s1 = inlined_call_operand.vmem [shape: f32[2,8,32], index: 1, kind: input, shape index: {}]
  %s2 = inlined_call_operand.vmem [shape: f32[3,32,64], index: 2, kind: input, shape index: {}]
  %s3 = inlined_call_operand.vmem [shape: f32[3,1,64], index: 3, kind: input, shape index: {}]
  %s4 = inlined_call_operand.vmem [shape: f32[3,32,32], index: 4, kind: input, shape index: {}]
  %s5 = inlined_call_operand.vmem [shape: f32[3,1,32], index: 5, kind: input, shape index: {}]
  %s6 = inlined_call_operand.vmem [shape: f32[3,1,32], index: 6, kind: input, shape index: {}]
  %s7 = inlined_call_operand.vmem [shape: f32[3,1,32], index: 7, kind: input, shape index: {}]
  %s8 = inlined_call_operand.vmem [shape: f32[3,32,64], index: 8, kind: input, shape index: {}]
  %s9 = inlined_call_operand.vmem [shape: f32[3,1,64], index: 9, kind: input, shape index: {}]
  %s10 = inlined_call_operand.vmem [shape: f32[3,64,32], index: 10, kind: input, shape index: {}]
  %s11 = inlined_call_operand.vmem [shape: f32[3,1,32], index: 11, kind: input, shape index: {}]
  %s12 = inlined_call_operand.vmem [shape: f32[3,1,32], index: 12, kind: input, shape index: {}]
  %s13 = inlined_call_operand.vmem [shape: f32[3,1,32], index: 13, kind: input, shape index: {}]
  %s14 = inlined_call_operand.vmem [shape: f32[3,2,8,8], index: 14, kind: input, shape index: {}]
  %s15 = inlined_call_operand.vmem [shape: f32[3,2,8,8], index: 15, kind: input, shape index: {}]
  %s16 = inlined_call_operand.vmem [shape: f32[3,2,8,8], index: 16, kind: input, shape index: {}]
  %s17 = inlined_call_operand.vmem [shape: f32[3,8,8], index: 17, kind: input, shape index: {}]
  %s18 = inlined_call_operand.vmem [shape: f32[8,8], index: 18, kind: input, shape index: {}]
  %s19 = inlined_call_operand.vmem [shape: f32[8,8], index: 19, kind: input, shape index: {}]
  %s20 = inlined_call_operand.vmem [shape: f32[2,1,32], index: 20, kind: input, shape index: {}]
  %s21 = inlined_call_operand.hbm [shape: f32[2,8,32], index: 21, kind: output, shape index: {}]
  %s22 = sld [smem:[#allocation0]]
  $region129: #{architecture_forward.1} parent=0
    _
  %s24 = ssub.s32 1, %s22
  %s25 = scalar_select 0, %s24, %s22
  $region1: #{architecture_forward.1} parent=0
    #allocation4 [shape = 'u8[8192]{0}', space=vmem, size = 0x2000, scoped, tag = 'output window, operand 0']
    #allocation5 [shape = 's32[2]{0}', space=sflag, size = 0x8, scoped, tag = 'scoped memory for architecture_forward.1']
    %26 = vsyncpa [#allocation5], 0
    %s27 = scalar_lea.sflag [#allocation5], 1
    %28 = vsyncpa %s27, 0
    loop: start=0, step=1, limit=8
    $region2: #{architecture_forward.1} parent=1 // loop_pre_header
      _
    $region3: #{architecture_forward.1} parent=1 // loop_header
      %s30 = sphi 0, %s34
      %p31 = scmp.ge.s32.totalorder %s30, 8
      %s37 = sphi 0, %s49
      %s38 = sphi 0, %s45
      %s39 = sphi 0, %s37
      %s40 = sphi 0, %s38
      %s41 = sphi 0, %s39
      %s42 = sphi 0, %s40
      %s52 = sphi 0, %s54
      %s55 = sphi 0, %s52
      %s56 = sphi 0, %s55
      %s72 = sphi 0, %s56
      %s78 = sphi 0, %s80
      %s81 = sphi 0, %s78
      %s82 = sphi 0, %s81
      %s98 = sphi 0, %s82
      %s104 = sphi 0, %s106
      %s107 = sphi 0, %s104
      %s108 = sphi 0, %s107
      %s124 = sphi 0, %s108
      %s130 = sphi 0, %s132
      %s133 = sphi 0, %s130
      %s134 = sphi 0, %s133
      %s150 = sphi 0, %s134
      %s156 = sphi 0, %s158
      %s159 = sphi 0, %s156
      %s160 = sphi 0, %s159
      %s176 = sphi 0, %s160
      %s182 = sphi 0, %s184
      %s185 = sphi 0, %s182
      %s186 = sphi 0, %s185
      %s202 = sphi 0, %s186
      %s208 = sphi 0, %s210
      %s211 = sphi 0, %s208
      %s212 = sphi 0, %s211
      %s228 = sphi 0, %s212
      %s234 = sphi 0, %s236
      %s237 = sphi 0, %s234
      %s238 = sphi 0, %s237
      %s254 = sphi 0, %s238
      %s260 = sphi 0, %s262
      %s263 = sphi 0, %s260
      %s264 = sphi 0, %s263
      %s280 = sphi 0, %s264
      %s286 = sphi 0, %s288
      %s289 = sphi 0, %s286
      %s290 = sphi 0, %s289
      %s306 = sphi 0, %s290
      %s312 = sphi 0, %s314
      %s315 = sphi 0, %s312
      %s316 = sphi 0, %s315
      %s332 = sphi 0, %s316
      %s338 = sphi 0, %s340
      %s341 = sphi 0, %s338
      %s342 = sphi 0, %s341
      %s358 = sphi 0, %s342
      %s364 = sphi 0, %s366
      %s367 = sphi 0, %s364
      %s368 = sphi 0, %s367
      %s384 = sphi 0, %s368
      %s390 = sphi 0, %s392
      %s393 = sphi 0, %s390
      %s394 = sphi 0, %s393
      %s410 = sphi 0, %s394
      %s416 = sphi 0, %s418
      %s419 = sphi 0, %s416
      %s420 = sphi 0, %s419
      %s436 = sphi 0, %s420
      %s442 = sphi 0, %s444
      %s445 = sphi 0, %s442
      %s446 = sphi 0, %s445
      %s462 = sphi 0, %s446
      %s468 = sphi 0, %s470
      %s471 = sphi 0, %s468
      %s472 = sphi 0, %s471
      %s488 = sphi 0, %s472
      %s494 = sphi 0, %s496
      %s497 = sphi 0, %s494
      %s498 = sphi 0, %s497
      %s514 = sphi 0, %s498
      %s518 = sphi 0, %s518
      %s520 = sphi 0, %s518
      %s521 = sphi 0, %s520
      %s535 = sphi 0, %s521
      %s539 = sphi 0, %s539
      %s541 = sphi 0, %s539
      %s542 = sphi 0, %s541
      %s556 = sphi 0, %s542
      %s560 = sphi 0, %s560
      %s562 = sphi 0, %s560
      %s563 = sphi 0, %s562
      %s577 = sphi 0, %s563
      %s583 = sphi 0, %s585
      %s586 = sphi 0, %s583
      %s587 = sphi 0, %s586
      %s603 = sphi 0, %s587
    $region4: #{architecture_forward.1} parent=1 // loop_header_branch
      %33 = sbr.rel (%p31) target = $region8
    $region5: #{architecture_forward.1} parent=1 // loop_body
      %s35 = ssub.s32 %s30, 1
      %s36 = ssub.s32 %s30, 2
      %s43 = sadd.s32 1, %s38
      %p44 = scmp.ge.s32.totalorder %s43, 3
      %s45 = scalar_select %p44, 0, %s43
      %s46 = sadd.s32 1, %s37
      %s47 = scalar_select %p44, %s46, %s37
      %p48 = scmp.ge.s32.totalorder %s47, 2
      %s49 = scalar_select %p48, 0, %s47
      %s50 = ssub.s32 %s37, %s49
      %p51 = scmp.eq.s32.totalorder %s50, 0
      %s53 = sadd.s32 %s52, 1
      %s54 = scalar_select %p51, %s52, %s53
      %p57 = pneg %p51
      %p58 = scmp.eq.s32.totalorder %s30, 5
      %p59 = por %p57, %p58
      %p60 = scmp.ne.s32.totalorder %s52, %s55
      %p61 = scmp.eq.s32.totalorder %s30, 0
      %p62 = por %p60, %p61
      %p63 = scmp.ne.s32.totalorder %s52, %s55
      %p64 = scmp.eq.s32.totalorder %s35, 5
      %p65 = por %p63, %p64
      %p66 = scmp.ne.s32.totalorder %s55, %s56
      %p67 = scmp.eq.s32.totalorder %s35, 0
      %p68 = por %p66, %p67
      %p69 = scmp.ne.s32.totalorder %s55, %s56
      %p70 = scmp.eq.s32.totalorder %s36, 5
      %p71 = por %p69, %p70
      %p73 = scmp.ne.s32.totalorder %s56, %s72
      %p74 = scmp.eq.s32.totalorder %s36, 0
      %p75 = por %p73, %p74
      %s76 = ssub.s32 %s37, %s49
      %p77 = scmp.eq.s32.totalorder %s76, 0
      %s79 = sadd.s32 %s78, 1
      %s80 = scalar_select %p77, %s78, %s79
      %p83 = pneg %p77
      %p84 = scmp.eq.s32.totalorder %s30, 5
      %p85 = por %p83, %p84
      %p86 = scmp.ne.s32.totalorder %s78, %s81
      %p87 = scmp.eq.s32.totalorder %s30, 0
      %p88 = por %p86, %p87
      %p89 = scmp.ne.s32.totalorder %s78, %s81
      %p90 = scmp.eq.s32.totalorder %s35, 5
      %p91 = por %p89, %p90
      %p92 = scmp.ne.s32.totalorder %s81, %s82
      %p93 = scmp.eq.s32.totalorder %s35, 0
      %p94 = por %p92, %p93
      %p95 = scmp.ne.s32.totalorder %s81, %s82
      %p96 = scmp.eq.s32.totalorder %s36, 5
      %p97 = por %p95, %p96
      %p99 = scmp.ne.s32.totalorder %s82, %s98
      %p100 = scmp.eq.s32.totalorder %s36, 0
      %p101 = por %p99, %p100
      %s102 = ssub.s32 %s38, %s45
      %p103 = scmp.eq.s32.totalorder %s102, 0
      %s105 = sadd.s32 %s104, 1
      %s106 = scalar_select %p103, %s104, %s105
      %p109 = pneg %p103
      %p110 = scmp.eq.s32.totalorder %s30, 5
      %p111 = por %p109, %p110
      %p112 = scmp.ne.s32.totalorder %s104, %s107
      %p113 = scmp.eq.s32.totalorder %s30, 0
      %p114 = por %p112, %p113
      %p115 = scmp.ne.s32.totalorder %s104, %s107
      %p116 = scmp.eq.s32.totalorder %s35, 5
      %p117 = por %p115, %p116
      %p118 = scmp.ne.s32.totalorder %s107, %s108
      %p119 = scmp.eq.s32.totalorder %s35, 0
      %p120 = por %p118, %p119
      %p121 = scmp.ne.s32.totalorder %s107, %s108
      %p122 = scmp.eq.s32.totalorder %s36, 5
      %p123 = por %p121, %p122
      %p125 = scmp.ne.s32.totalorder %s108, %s124
      %p126 = scmp.eq.s32.totalorder %s36, 0
      %p127 = por %p125, %p126
      %s128 = ssub.s32 %s38, %s45
      %p129 = scmp.eq.s32.totalorder %s128, 0
      %s131 = sadd.s32 %s130, 1
      %s132 = scalar_select %p129, %s130, %s131
      %p135 = pneg %p129
      %p136 = scmp.eq.s32.totalorder %s30, 5
      %p137 = por %p135, %p136
      %p138 = scmp.ne.s32.totalorder %s130, %s133
      %p139 = scmp.eq.s32.totalorder %s30, 0
      %p140 = por %p138, %p139
      %p141 = scmp.ne.s32.totalorder %s130, %s133
      %p142 = scmp.eq.s32.totalorder %s35, 5
      %p143 = por %p141, %p142
      %p144 = scmp.ne.s32.totalorder %s133, %s134
      %p145 = scmp.eq.s32.totalorder %s35, 0
      %p146 = por %p144, %p145
      %p147 = scmp.ne.s32.totalorder %s133, %s134
      %p148 = scmp.eq.s32.totalorder %s36, 5
      %p149 = por %p147, %p148
      %p151 = scmp.ne.s32.totalorder %s134, %s150
      %p152 = scmp.eq.s32.totalorder %s36, 0
      %p153 = por %p151, %p152
      %s154 = ssub.s32 %s38, %s45
      %p155 = scmp.eq.s32.totalorder %s154, 0
      %s157 = sadd.s32 %s156, 1
      %s158 = scalar_select %p155, %s156, %s157
      %p161 = pneg %p155
      %p162 = scmp.eq.s32.totalorder %s30, 5
      %p163 = por %p161, %p162
      %p164 = scmp.ne.s32.totalorder %s156, %s159
      %p165 = scmp.eq.s32.totalorder %s30, 0
      %p166 = por %p164, %p165
      %p167 = scmp.ne.s32.totalorder %s156, %s159
      %p168 = scmp.eq.s32.totalorder %s35, 5
      %p169 = por %p167, %p168
      %p170 = scmp.ne.s32.totalorder %s159, %s160
      %p171 = scmp.eq.s32.totalorder %s35, 0
      %p172 = por %p170, %p171
      %p173 = scmp.ne.s32.totalorder %s159, %s160
      %p174 = scmp.eq.s32.totalorder %s36, 5
      %p175 = por %p173, %p174
      %p177 = scmp.ne.s32.totalorder %s160, %s176
      %p178 = scmp.eq.s32.totalorder %s36, 0
      %p179 = por %p177, %p178
      %s180 = ssub.s32 %s38, %s45
      %p181 = scmp.eq.s32.totalorder %s180, 0
      %s183 = sadd.s32 %s182, 1
      %s184 = scalar_select %p181, %s182, %s183
      %p187 = pneg %p181
      %p188 = scmp.eq.s32.totalorder %s30, 5
      %p189 = por %p187, %p188
      %p190 = scmp.ne.s32.totalorder %s182, %s185
      %p191 = scmp.eq.s32.totalorder %s30, 0
      %p192 = por %p190, %p191
      %p193 = scmp.ne.s32.totalorder %s182, %s185
      %p194 = scmp.eq.s32.totalorder %s35, 5
      %p195 = por %p193, %p194
      %p196 = scmp.ne.s32.totalorder %s185, %s186
      %p197 = scmp.eq.s32.totalorder %s35, 0
      %p198 = por %p196, %p197
      %p199 = scmp.ne.s32.totalorder %s185, %s186
      %p200 = scmp.eq.s32.totalorder %s36, 5
      %p201 = por %p199, %p200
      %p203 = scmp.ne.s32.totalorder %s186, %s202
      %p204 = scmp.eq.s32.totalorder %s36, 0
      %p205 = por %p203, %p204
      %s206 = ssub.s32 %s38, %s45
      %p207 = scmp.eq.s32.totalorder %s206, 0
      %s209 = sadd.s32 %s208, 1
      %s210 = scalar_select %p207, %s208, %s209
      %p213 = pneg %p207
      %p214 = scmp.eq.s32.totalorder %s30, 5
      %p215 = por %p213, %p214
      %p216 = scmp.ne.s32.totalorder %s208, %s211
      %p217 = scmp.eq.s32.totalorder %s30, 0
      %p218 = por %p216, %p217
      %p219 = scmp.ne.s32.totalorder %s208, %s211
      %p220 = scmp.eq.s32.totalorder %s35, 5
      %p221 = por %p219, %p220
      %p222 = scmp.ne.s32.totalorder %s211, %s212
      %p223 = scmp.eq.s32.totalorder %s35, 0
      %p224 = por %p222, %p223
      %p225 = scmp.ne.s32.totalorder %s211, %s212
      %p226 = scmp.eq.s32.totalorder %s36, 5
      %p227 = por %p225, %p226
      %p229 = scmp.ne.s32.totalorder %s212, %s228
      %p230 = scmp.eq.s32.totalorder %s36, 0
      %p231 = por %p229, %p230
      %s232 = ssub.s32 %s38, %s45
      %p233 = scmp.eq.s32.totalorder %s232, 0
      %s235 = sadd.s32 %s234, 1
      %s236 = scalar_select %p233, %s234, %s235
      %p239 = pneg %p233
      %p240 = scmp.eq.s32.totalorder %s30, 5
      %p241 = por %p239, %p240
      %p242 = scmp.ne.s32.totalorder %s234, %s237
      %p243 = scmp.eq.s32.totalorder %s30, 0
      %p244 = por %p242, %p243
      %p245 = scmp.ne.s32.totalorder %s234, %s237
      %p246 = scmp.eq.s32.totalorder %s35, 5
      %p247 = por %p245, %p246
      %p248 = scmp.ne.s32.totalorder %s237, %s238
      %p249 = scmp.eq.s32.totalorder %s35, 0
      %p250 = por %p248, %p249
      %p251 = scmp.ne.s32.totalorder %s237, %s238
      %p252 = scmp.eq.s32.totalorder %s36, 5
      %p253 = por %p251, %p252
      %p255 = scmp.ne.s32.totalorder %s238, %s254
      %p256 = scmp.eq.s32.totalorder %s36, 0
      %p257 = por %p255, %p256
      %s258 = ssub.s32 %s38, %s45
      %p259 = scmp.eq.s32.totalorder %s258, 0
      %s261 = sadd.s32 %s260, 1
      %s262 = scalar_select %p259, %s260, %s261
      %p265 = pneg %p259
      %p266 = scmp.eq.s32.totalorder %s30, 5
      %p267 = por %p265, %p266
      %p268 = scmp.ne.s32.totalorder %s260, %s263
      %p269 = scmp.eq.s32.totalorder %s30, 0
      %p270 = por %p268, %p269
      %p271 = scmp.ne.s32.totalorder %s260, %s263
      %p272 = scmp.eq.s32.totalorder %s35, 5
      %p273 = por %p271, %p272
      %p274 = scmp.ne.s32.totalorder %s263, %s264
      %p275 = scmp.eq.s32.totalorder %s35, 0
      %p276 = por %p274, %p275
      %p277 = scmp.ne.s32.totalorder %s263, %s264
      %p278 = scmp.eq.s32.totalorder %s36, 5
      %p279 = por %p277, %p278
      %p281 = scmp.ne.s32.totalorder %s264, %s280
      %p282 = scmp.eq.s32.totalorder %s36, 0
      %p283 = por %p281, %p282
      %s284 = ssub.s32 %s38, %s45
      %p285 = scmp.eq.s32.totalorder %s284, 0
      %s287 = sadd.s32 %s286, 1
      %s288 = scalar_select %p285, %s286, %s287
      %p291 = pneg %p285
      %p292 = scmp.eq.s32.totalorder %s30, 5
      %p293 = por %p291, %p292
      %p294 = scmp.ne.s32.totalorder %s286, %s289
      %p295 = scmp.eq.s32.totalorder %s30, 0
      %p296 = por %p294, %p295
      %p297 = scmp.ne.s32.totalorder %s286, %s289
      %p298 = scmp.eq.s32.totalorder %s35, 5
      %p299 = por %p297, %p298
      %p300 = scmp.ne.s32.totalorder %s289, %s290
      %p301 = scmp.eq.s32.totalorder %s35, 0
      %p302 = por %p300, %p301
      %p303 = scmp.ne.s32.totalorder %s289, %s290
      %p304 = scmp.eq.s32.totalorder %s36, 5
      %p305 = por %p303, %p304
      %p307 = scmp.ne.s32.totalorder %s290, %s306
      %p308 = scmp.eq.s32.totalorder %s36, 0
      %p309 = por %p307, %p308
      %s310 = ssub.s32 %s38, %s45
      %p311 = scmp.eq.s32.totalorder %s310, 0
      %s313 = sadd.s32 %s312, 1
      %s314 = scalar_select %p311, %s312, %s313
      %p317 = pneg %p311
      %p318 = scmp.eq.s32.totalorder %s30, 5
      %p319 = por %p317, %p318
      %p320 = scmp.ne.s32.totalorder %s312, %s315
      %p321 = scmp.eq.s32.totalorder %s30, 0
      %p322 = por %p320, %p321
      %p323 = scmp.ne.s32.totalorder %s312, %s315
      %p324 = scmp.eq.s32.totalorder %s35, 5
      %p325 = por %p323, %p324
      %p326 = scmp.ne.s32.totalorder %s315, %s316
      %p327 = scmp.eq.s32.totalorder %s35, 0
      %p328 = por %p326, %p327
      %p329 = scmp.ne.s32.totalorder %s315, %s316
      %p330 = scmp.eq.s32.totalorder %s36, 5
      %p331 = por %p329, %p330
      %p333 = scmp.ne.s32.totalorder %s316, %s332
      %p334 = scmp.eq.s32.totalorder %s36, 0
      %p335 = por %p333, %p334
      %s336 = ssub.s32 %s38, %s45
      %p337 = scmp.eq.s32.totalorder %s336, 0
      %s339 = sadd.s32 %s338, 1
      %s340 = scalar_select %p337, %s338, %s339
      %p343 = pneg %p337
      %p344 = scmp.eq.s32.totalorder %s30, 5
      %p345 = por %p343, %p344
      %p346 = scmp.ne.s32.totalorder %s338, %s341
      %p347 = scmp.eq.s32.totalorder %s30, 0
      %p348 = por %p346, %p347
      %p349 = scmp.ne.s32.totalorder %s338, %s341
      %p350 = scmp.eq.s32.totalorder %s35, 5
      %p351 = por %p349, %p350
      %p352 = scmp.ne.s32.totalorder %s341, %s342
      %p353 = scmp.eq.s32.totalorder %s35, 0
      %p354 = por %p352, %p353
      %p355 = scmp.ne.s32.totalorder %s341, %s342
      %p356 = scmp.eq.s32.totalorder %s36, 5
      %p357 = por %p355, %p356
      %p359 = scmp.ne.s32.totalorder %s342, %s358
      %p360 = scmp.eq.s32.totalorder %s36, 0
      %p361 = por %p359, %p360
      %s362 = ssub.s32 %s38, %s45
      %p363 = scmp.eq.s32.totalorder %s362, 0
      %s365 = sadd.s32 %s364, 1
      %s366 = scalar_select %p363, %s364, %s365
      %p369 = pneg %p363
      %p370 = scmp.eq.s32.totalorder %s30, 5
      %p371 = por %p369, %p370
      %p372 = scmp.ne.s32.totalorder %s364, %s367
      %p373 = scmp.eq.s32.totalorder %s30, 0
      %p374 = por %p372, %p373
      %p375 = scmp.ne.s32.totalorder %s364, %s367
      %p376 = scmp.eq.s32.totalorder %s35, 5
      %p377 = por %p375, %p376
      %p378 = scmp.ne.s32.totalorder %s367, %s368
      %p379 = scmp.eq.s32.totalorder %s35, 0
      %p380 = por %p378, %p379
      %p381 = scmp.ne.s32.totalorder %s367, %s368
      %p382 = scmp.eq.s32.totalorder %s36, 5
      %p383 = por %p381, %p382
      %p385 = scmp.ne.s32.totalorder %s368, %s384
      %p386 = scmp.eq.s32.totalorder %s36, 0
      %p387 = por %p385, %p386
      %s388 = ssub.s32 %s38, %s45
      %p389 = scmp.eq.s32.totalorder %s388, 0
      %s391 = sadd.s32 %s390, 1
      %s392 = scalar_select %p389, %s390, %s391
      %p395 = pneg %p389
      %p396 = scmp.eq.s32.totalorder %s30, 5
      %p397 = por %p395, %p396
      %p398 = scmp.ne.s32.totalorder %s390, %s393
      %p399 = scmp.eq.s32.totalorder %s30, 0
      %p400 = por %p398, %p399
      %p401 = scmp.ne.s32.totalorder %s390, %s393
      %p402 = scmp.eq.s32.totalorder %s35, 5
      %p403 = por %p401, %p402
      %p404 = scmp.ne.s32.totalorder %s393, %s394
      %p405 = scmp.eq.s32.totalorder %s35, 0
      %p406 = por %p404, %p405
      %p407 = scmp.ne.s32.totalorder %s393, %s394
      %p408 = scmp.eq.s32.totalorder %s36, 5
      %p409 = por %p407, %p408
      %p411 = scmp.ne.s32.totalorder %s394, %s410
      %p412 = scmp.eq.s32.totalorder %s36, 0
      %p413 = por %p411, %p412
      %s414 = ssub.s32 %s38, %s45
      %p415 = scmp.eq.s32.totalorder %s414, 0
      %s417 = sadd.s32 %s416, 1
      %s418 = scalar_select %p415, %s416, %s417
      %p421 = pneg %p415
      %p422 = scmp.eq.s32.totalorder %s30, 5
      %p423 = por %p421, %p422
      %p424 = scmp.ne.s32.totalorder %s416, %s419
      %p425 = scmp.eq.s32.totalorder %s30, 0
      %p426 = por %p424, %p425
      %p427 = scmp.ne.s32.totalorder %s416, %s419
      %p428 = scmp.eq.s32.totalorder %s35, 5
      %p429 = por %p427, %p428
      %p430 = scmp.ne.s32.totalorder %s419, %s420
      %p431 = scmp.eq.s32.totalorder %s35, 0
      %p432 = por %p430, %p431
      %p433 = scmp.ne.s32.totalorder %s419, %s420
      %p434 = scmp.eq.s32.totalorder %s36, 5
      %p435 = por %p433, %p434
      %p437 = scmp.ne.s32.totalorder %s420, %s436
      %p438 = scmp.eq.s32.totalorder %s36, 0
      %p439 = por %p437, %p438
      %s440 = ssub.s32 %s38, %s45
      %p441 = scmp.eq.s32.totalorder %s440, 0
      %s443 = sadd.s32 %s442, 1
      %s444 = scalar_select %p441, %s442, %s443
      %p447 = pneg %p441
      %p448 = scmp.eq.s32.totalorder %s30, 5
      %p449 = por %p447, %p448
      %p450 = scmp.ne.s32.totalorder %s442, %s445
      %p451 = scmp.eq.s32.totalorder %s30, 0
      %p452 = por %p450, %p451
      %p453 = scmp.ne.s32.totalorder %s442, %s445
      %p454 = scmp.eq.s32.totalorder %s35, 5
      %p455 = por %p453, %p454
      %p456 = scmp.ne.s32.totalorder %s445, %s446
      %p457 = scmp.eq.s32.totalorder %s35, 0
      %p458 = por %p456, %p457
      %p459 = scmp.ne.s32.totalorder %s445, %s446
      %p460 = scmp.eq.s32.totalorder %s36, 5
      %p461 = por %p459, %p460
      %p463 = scmp.ne.s32.totalorder %s446, %s462
      %p464 = scmp.eq.s32.totalorder %s36, 0
      %p465 = por %p463, %p464
      %s466 = ssub.s32 %s38, %s45
      %p467 = scmp.eq.s32.totalorder %s466, 0
      %s469 = sadd.s32 %s468, 1
      %s470 = scalar_select %p467, %s468, %s469
      %p473 = pneg %p467
      %p474 = scmp.eq.s32.totalorder %s30, 5
      %p475 = por %p473, %p474
      %p476 = scmp.ne.s32.totalorder %s468, %s471
      %p477 = scmp.eq.s32.totalorder %s30, 0
      %p478 = por %p476, %p477
      %p479 = scmp.ne.s32.totalorder %s468, %s471
      %p480 = scmp.eq.s32.totalorder %s35, 5
      %p481 = por %p479, %p480
      %p482 = scmp.ne.s32.totalorder %s471, %s472
      %p483 = scmp.eq.s32.totalorder %s35, 0
      %p484 = por %p482, %p483
      %p485 = scmp.ne.s32.totalorder %s471, %s472
      %p486 = scmp.eq.s32.totalorder %s36, 5
      %p487 = por %p485, %p486
      %p489 = scmp.ne.s32.totalorder %s472, %s488
      %p490 = scmp.eq.s32.totalorder %s36, 0
      %p491 = por %p489, %p490
      %s492 = ssub.s32 %s38, %s45
      %p493 = scmp.eq.s32.totalorder %s492, 0
      %s495 = sadd.s32 %s494, 1
      %s496 = scalar_select %p493, %s494, %s495
      %p499 = pneg %p493
      %p500 = scmp.eq.s32.totalorder %s30, 5
      %p501 = por %p499, %p500
      %p502 = scmp.ne.s32.totalorder %s494, %s497
      %p503 = scmp.eq.s32.totalorder %s30, 0
      %p504 = por %p502, %p503
      %p505 = scmp.ne.s32.totalorder %s494, %s497
      %p506 = scmp.eq.s32.totalorder %s35, 5
      %p507 = por %p505, %p506
      %p508 = scmp.ne.s32.totalorder %s497, %s498
      %p509 = scmp.eq.s32.totalorder %s35, 0
      %p510 = por %p508, %p509
      %p511 = scmp.ne.s32.totalorder %s497, %s498
      %p512 = scmp.eq.s32.totalorder %s36, 5
      %p513 = por %p511, %p512
      %p515 = scmp.ne.s32.totalorder %s498, %s514
      %p516 = scmp.eq.s32.totalorder %s36, 0
      %p517 = por %p515, %p516
      %s519 = sadd.s32 %s518, 1
      %p522 = scmp.eq.s32.totalorder %s30, 5
      %p523 = scmp.ne.s32.totalorder %s518, %s520
      %p524 = scmp.eq.s32.totalorder %s30, 0
      %p525 = por %p523, %p524
      %p526 = scmp.ne.s32.totalorder %s518, %s520
      %p527 = scmp.eq.s32.totalorder %s35, 5
      %p528 = por %p526, %p527
      %p529 = scmp.ne.s32.totalorder %s520, %s521
      %p530 = scmp.eq.s32.totalorder %s35, 0
      %p531 = por %p529, %p530
      %p532 = scmp.ne.s32.totalorder %s520, %s521
      %p533 = scmp.eq.s32.totalorder %s36, 5
      %p534 = por %p532, %p533
      %p536 = scmp.ne.s32.totalorder %s521, %s535
      %p537 = scmp.eq.s32.totalorder %s36, 0
      %p538 = por %p536, %p537
      %s540 = sadd.s32 %s539, 1
      %p543 = scmp.eq.s32.totalorder %s30, 5
      %p544 = scmp.ne.s32.totalorder %s539, %s541
      %p545 = scmp.eq.s32.totalorder %s30, 0
      %p546 = por %p544, %p545
      %p547 = scmp.ne.s32.totalorder %s539, %s541
      %p548 = scmp.eq.s32.totalorder %s35, 5
      %p549 = por %p547, %p548
      %p550 = scmp.ne.s32.totalorder %s541, %s542
      %p551 = scmp.eq.s32.totalorder %s35, 0
      %p552 = por %p550, %p551
      %p553 = scmp.ne.s32.totalorder %s541, %s542
      %p554 = scmp.eq.s32.totalorder %s36, 5
      %p555 = por %p553, %p554
      %p557 = scmp.ne.s32.totalorder %s542, %s556
      %p558 = scmp.eq.s32.totalorder %s36, 0
      %p559 = por %p557, %p558
      %s561 = sadd.s32 %s560, 1
      %p564 = scmp.eq.s32.totalorder %s30, 5
      %p565 = scmp.ne.s32.totalorder %s560, %s562
      %p566 = scmp.eq.s32.totalorder %s30, 0
      %p567 = por %p565, %p566
      %p568 = scmp.ne.s32.totalorder %s560, %s562
      %p569 = scmp.eq.s32.totalorder %s35, 5
      %p570 = por %p568, %p569
      %p571 = scmp.ne.s32.totalorder %s562, %s563
      %p572 = scmp.eq.s32.totalorder %s35, 0
      %p573 = por %p571, %p572
      %p574 = scmp.ne.s32.totalorder %s562, %s563
      %p575 = scmp.eq.s32.totalorder %s36, 5
      %p576 = por %p574, %p575
      %p578 = scmp.ne.s32.totalorder %s563, %s577
      %p579 = scmp.eq.s32.totalorder %s36, 0
      %p580 = por %p578, %p579
      %s581 = ssub.s32 %s37, %s49
      %p582 = scmp.eq.s32.totalorder %s581, 0
      %s584 = sadd.s32 %s583, 1
      %s585 = scalar_select %p582, %s583, %s584
      %p588 = pneg %p582
      %p589 = scmp.eq.s32.totalorder %s30, 5
      %p590 = por %p588, %p589
      %p591 = scmp.ne.s32.totalorder %s583, %s586
      %p592 = scmp.eq.s32.totalorder %s30, 0
      %p593 = por %p591, %p592
      %p594 = scmp.ne.s32.totalorder %s583, %s586
      %p595 = scmp.eq.s32.totalorder %s35, 5
      %p596 = por %p594, %p595
      %p597 = scmp.ne.s32.totalorder %s586, %s587
      %p598 = scmp.eq.s32.totalorder %s35, 0
      %p599 = por %p597, %p598
      %p600 = scmp.ne.s32.totalorder %s586, %s587
      %p601 = scmp.eq.s32.totalorder %s36, 5
      %p602 = por %p600, %p601
      %p604 = scmp.ne.s32.totalorder %s587, %s603
      %p605 = scmp.eq.s32.totalorder %s36, 0
      %p606 = por %p604, %p605
      %p607 = scmp.le.s32.totalorder 1, %s30
      %p608 = scmp.lt.s32.totalorder %s30, 7
      %p609 = pnand %p607, %p608
      %p610 = pneg %p609
      // Predicated region
      $region9: #{architecture_forward.1} parent=5 // pred_check
        _
      $region10: #{architecture_forward.1} parent=5 // pred_check_branch
        %612 = sbr.rel (%p609) target = $region12
      $region11: #{architecture_forward.1} parent=5 // pred_region
        %s613 = ssub.s32 %s30, 1
        // Predicated region
        $region13: #{architecture_forward.1} parent=11 // pred_check
          %p614 = pneg %p531
        $region14: #{architecture_forward.1} parent=11 // pred_check_branch
          %616 = sbr.rel (%p614) target = $region16
        $region15: #{architecture_forward.1} parent=11 // pred_region
          _
        $region16: #{architecture_forward.1} parent=11 // pred_fallthru
          _
        // Predicated region
        $region17: #{architecture_forward.1} parent=11 // pred_check
          %p617 = pneg %p552
        $region18: #{architecture_forward.1} parent=11 // pred_check_branch
          %619 = sbr.rel (%p617) target = $region20
        $region19: #{architecture_forward.1} parent=11 // pred_region
          _
        $region20: #{architecture_forward.1} parent=11 // pred_fallthru
          _
        // Predicated region
        $region21: #{architecture_forward.1} parent=11 // pred_check
          %p620 = pneg %p573
        $region22: #{architecture_forward.1} parent=11 // pred_check_branch
          %622 = sbr.rel (%p620) target = $region24
        $region23: #{architecture_forward.1} parent=11 // pred_region
          _
        $region24: #{architecture_forward.1} parent=11 // pred_fallthru
          _
      $region12: #{architecture_forward.1} parent=5 // pred_fallthru
        _
      %p623 = scmp.lt.s32.totalorder %s30, 6
      // Predicated region
      $region25: #{architecture_forward.1} parent=5 // pred_check
        %p624 = pneg %p623
      $region26: #{architecture_forward.1} parent=5 // pred_check_branch
        %626 = sbr.rel (%p624) target = $region28
      $region27: #{architecture_forward.1} parent=5 // pred_region
        // Predicated region
        $region29: #{architecture_forward.1} parent=27 // pred_check
          %p627 = pneg %p62
        $region30: #{architecture_forward.1} parent=27 // pred_check_branch
          %629 = sbr.rel (%p627) target = $region32
        $region31: #{architecture_forward.1} parent=27 // pred_region
          %p630 = scmp.lt.s32.totalorder %s37, 1
          %s631 = scalar_select %p630, %s37, 1
          %s632 = smul.addr %s631, 8
          %s633 = scalar_lea.vmem %s0, %s632
        $region32: #{architecture_forward.1} parent=27 // pred_fallthru
          _
        // Predicated region
        $region33: #{architecture_forward.1} parent=27 // pred_check
          %p634 = pneg %p88
        $region34: #{architecture_forward.1} parent=27 // pred_check_branch
          %636 = sbr.rel (%p634) target = $region36
        $region35: #{architecture_forward.1} parent=27 // pred_region
          %p637 = scmp.lt.s32.totalorder %s37, 1
          %s638 = scalar_select %p637, %s37, 1
          %s639 = smul.addr %s638, 8
          %s640 = scalar_lea.vmem %s1, %s639
        $region36: #{architecture_forward.1} parent=27 // pred_fallthru
          _
        // Predicated region
        $region37: #{architecture_forward.1} parent=27 // pred_check
          %p641 = pneg %p114
        $region38: #{architecture_forward.1} parent=27 // pred_check_branch
          %643 = sbr.rel (%p641) target = $region40
        $region39: #{architecture_forward.1} parent=27 // pred_region
          %p644 = scmp.lt.s32.totalorder %s38, 2
          %s645 = scalar_select %p644, %s38, 2
          %s646 = smul.addr %s645, 4
          %s647 = smul.addr %s646, 8
          %s648 = scalar_lea.vmem %s2, %s647
        $region40: #{architecture_forward.1} parent=27 // pred_fallthru
          _
        // Predicated region
        $region41: #{architecture_forward.1} parent=27 // pred_check
          %p649 = pneg %p140
        $region42: #{architecture_forward.1} parent=27 // pred_check_branch
          %651 = sbr.rel (%p649) target = $region44
        $region43: #{architecture_forward.1} parent=27 // pred_region
          %p652 = scmp.lt.s32.totalorder %s38, 2
          %s653 = scalar_select %p652, %s38, 2
          %s654 = scalar_lea.vmem %s3, %s653
        $region44: #{architecture_forward.1} parent=27 // pred_fallthru
          _
        // Predicated region
        $region45: #{architecture_forward.1} parent=27 // pred_check
          %p655 = pneg %p166
        $region46: #{architecture_forward.1} parent=27 // pred_check_branch
          %657 = sbr.rel (%p655) target = $region48
        $region47: #{architecture_forward.1} parent=27 // pred_region
          %p658 = scmp.lt.s32.totalorder %s38, 2
          %s659 = scalar_select %p658, %s38, 2
          %s660 = smul.addr %s659, 4
          %s661 = smul.addr %s660, 8
          %s662 = scalar_lea.vmem %s4, %s661
        $region48: #{architecture_forward.1} parent=27 // pred_fallthru
          _
        // Predicated region
        $region49: #{architecture_forward.1} parent=27 // pred_check
          %p663 = pneg %p192
        $region50: #{architecture_forward.1} parent=27 // pred_check_branch
          %665 = sbr.rel (%p663) target = $region52
        $region51: #{architecture_forward.1} parent=27 // pred_region
          %p666 = scmp.lt.s32.totalorder %s38, 2
          %s667 = scalar_select %p666, %s38, 2
          %s668 = scalar_lea.vmem %s5, %s667
        $region52: #{architecture_forward.1} parent=27 // pred_fallthru
          _
        // Predicated region
        $region53: #{architecture_forward.1} parent=27 // pred_check
          %p669 = pneg %p218
        $region54: #{architecture_forward.1} parent=27 // pred_check_branch
          %671 = sbr.rel (%p669) target = $region56
        $region55: #{architecture_forward.1} parent=27 // pred_region
          %p672 = scmp.lt.s32.totalorder %s38, 2
          %s673 = scalar_select %p672, %s38, 2
          %s674 = scalar_lea.vmem %s6, %s673
        $region56: #{architecture_forward.1} parent=27 // pred_fallthru
          _
        // Predicated region
        $region57: #{architecture_forward.1} parent=27 // pred_check
          %p675 = pneg %p244
        $region58: #{architecture_forward.1} parent=27 // pred_check_branch
          %677 = sbr.rel (%p675) target = $region60
        $region59: #{architecture_forward.1} parent=27 // pred_region
          %p678 = scmp.lt.s32.totalorder %s38, 2
          %s679 = scalar_select %p678, %s38, 2
          %s680 = scalar_lea.vmem %s7, %s679
        $region60: #{architecture_forward.1} parent=27 // pred_fallthru
          _
        // Predicated region
        $region61: #{architecture_forward.1} parent=27 // pred_check
          %p681 = pneg %p270
        $region62: #{architecture_forward.1} parent=27 // pred_check_branch
          %683 = sbr.rel (%p681) target = $region64
        $region63: #{architecture_forward.1} parent=27 // pred_region
          %p684 = scmp.lt.s32.totalorder %s38, 2
          %s685 = scalar_select %p684, %s38, 2
          %s686 = smul.addr %s685, 4
          %s687 = smul.addr %s686, 8
          %s688 = scalar_lea.vmem %s8, %s687
        $region64: #{architecture_forward.1} parent=27 // pred_fallthru
          _
        // Predicated region
        $region65: #{architecture_forward.1} parent=27 // pred_check
          %p689 = pneg %p296
        $region66: #{architecture_forward.1} parent=27 // pred_check_branch
          %691 = sbr.rel (%p689) target = $region68
        $region67: #{architecture_forward.1} parent=27 // pred_region
          %p692 = scmp.lt.s32.totalorder %s38, 2
          %s693 = scalar_select %p692, %s38, 2
          %s694 = scalar_lea.vmem %s9, %s693
        $region68: #{architecture_forward.1} parent=27 // pred_fallthru
          _
        // Predicated region
        $region69: #{architecture_forward.1} parent=27 // pred_check
          %p695 = pneg %p322
        $region70: #{architecture_forward.1} parent=27 // pred_check_branch
          %697 = sbr.rel (%p695) target = $region72
        $region71: #{architecture_forward.1} parent=27 // pred_region
          %p698 = scmp.lt.s32.totalorder %s38, 2
          %s699 = scalar_select %p698, %s38, 2
          %s700 = smul.addr %s699, 8
          %s701 = smul.addr %s700, 8
          %s702 = scalar_lea.vmem %s10, %s701
        $region72: #{architecture_forward.1} parent=27 // pred_fallthru
          _
        // Predicated region
        $region73: #{architecture_forward.1} parent=27 // pred_check
          %p703 = pneg %p348
        $region74: #{architecture_forward.1} parent=27 // pred_check_branch
          %705 = sbr.rel (%p703) target = $region76
        $region75: #{architecture_forward.1} parent=27 // pred_region
          %p706 = scmp.lt.s32.totalorder %s38, 2
          %s707 = scalar_select %p706, %s38, 2
          %s708 = scalar_lea.vmem %s11, %s707
        $region76: #{architecture_forward.1} parent=27 // pred_fallthru
          _
        // Predicated region
        $region77: #{architecture_forward.1} parent=27 // pred_check
          %p709 = pneg %p374
        $region78: #{architecture_forward.1} parent=27 // pred_check_branch
          %711 = sbr.rel (%p709) target = $region80
        $region79: #{architecture_forward.1} parent=27 // pred_region
          %p712 = scmp.lt.s32.totalorder %s38, 2
          %s713 = scalar_select %p712, %s38, 2
          %s714 = scalar_lea.vmem %s12, %s713
        $region80: #{architecture_forward.1} parent=27 // pred_fallthru
          _
        // Predicated region
        $region81: #{architecture_forward.1} parent=27 // pred_check
          %p715 = pneg %p400
        $region82: #{architecture_forward.1} parent=27 // pred_check_branch
          %717 = sbr.rel (%p715) target = $region84
        $region83: #{architecture_forward.1} parent=27 // pred_region
          %p718 = scmp.lt.s32.totalorder %s38, 2
          %s719 = scalar_select %p718, %s38, 2
          %s720 = scalar_lea.vmem %s13, %s719
        $region84: #{architecture_forward.1} parent=27 // pred_fallthru
          _
        // Predicated region
        $region85: #{architecture_forward.1} parent=27 // pred_check
          %p721 = pneg %p426
        $region86: #{architecture_forward.1} parent=27 // pred_check_branch
          %723 = sbr.rel (%p721) target = $region88
        $region87: #{architecture_forward.1} parent=27 // pred_region
          %p724 = scmp.lt.s32.totalorder %s38, 2
          %s725 = scalar_select %p724, %s38, 2
          %s726 = smul.addr %s725, 2
          %s727 = smul.addr %s726, 8
          %s728 = scalar_lea.vmem %s14, %s727
        $region88: #{architecture_forward.1} parent=27 // pred_fallthru
          _
        // Predicated region
        $region89: #{architecture_forward.1} parent=27 // pred_check
          %p729 = pneg %p452
        $region90: #{architecture_forward.1} parent=27 // pred_check_branch
          %731 = sbr.rel (%p729) target = $region92
        $region91: #{architecture_forward.1} parent=27 // pred_region
          %p732 = scmp.lt.s32.totalorder %s38, 2
          %s733 = scalar_select %p732, %s38, 2
          %s734 = smul.addr %s733, 2
          %s735 = smul.addr %s734, 8
          %s736 = scalar_lea.vmem %s15, %s735
        $region92: #{architecture_forward.1} parent=27 // pred_fallthru
          _
        // Predicated region
        $region93: #{architecture_forward.1} parent=27 // pred_check
          %p737 = pneg %p478
        $region94: #{architecture_forward.1} parent=27 // pred_check_branch
          %739 = sbr.rel (%p737) target = $region96
        $region95: #{architecture_forward.1} parent=27 // pred_region
          %p740 = scmp.lt.s32.totalorder %s38, 2
          %s741 = scalar_select %p740, %s38, 2
          %s742 = smul.addr %s741, 2
          %s743 = smul.addr %s742, 8
          %s744 = scalar_lea.vmem %s16, %s743
        $region96: #{architecture_forward.1} parent=27 // pred_fallthru
          _
        // Predicated region
        $region97: #{architecture_forward.1} parent=27 // pred_check
          %p745 = pneg %p504
        $region98: #{architecture_forward.1} parent=27 // pred_check_branch
          %747 = sbr.rel (%p745) target = $region100
        $region99: #{architecture_forward.1} parent=27 // pred_region
          %p748 = scmp.lt.s32.totalorder %s38, 2
          %s749 = scalar_select %p748, %s38, 2
          %s750 = smul.addr %s749, 8
          %s751 = scalar_lea.vmem %s17, %s750
        $region100: #{architecture_forward.1} parent=27 // pred_fallthru
          _
      $region28: #{architecture_forward.1} parent=5 // pred_fallthru
        _
      %p752 = scmp.le.s32.totalorder 1, %s30
      %p753 = scmp.lt.s32.totalorder %s30, 7
      %p754 = pnand %p752, %p753
      %p755 = pneg %p754
      // Predicated region
      $region101: #{architecture_forward.1} parent=5 // pred_check
        _
      $region102: #{architecture_forward.1} parent=5 // pred_check_branch
        %757 = sbr.rel (%p754) target = $region104
      $region103: #{architecture_forward.1} parent=5 // pred_region
        %s758 = ssub.s32 %s30, 1
        %p759 = scmp.lt.s32.totalorder %s39, 1
        %s760 = scalar_select %p759, %s39, 1
        %s761 = smul.addr %s760, 8
        %s762 = scalar_lea.vmem %s0, %s761
        %p763 = pneg %p68
        %p764 = pneg %p65
        %p765 = scmp.lt.s32.totalorder %s39, 1
        %s766 = scalar_select %p765, %s39, 1
        %s767 = smul.addr %s766, 8
        %s768 = scalar_lea.vmem %s1, %s767
        %p769 = pneg %p94
        %p770 = pneg %p91
        %p771 = scmp.lt.s32.totalorder %s40, 2
        %s772 = scalar_select %p771, %s40, 2
        %s773 = smul.addr %s772, 4
        %s774 = smul.addr %s773, 8
        %s775 = scalar_lea.vmem %s2, %s774
        %p776 = pneg %p120
        %p777 = pneg %p117
        %p778 = scmp.lt.s32.totalorder %s40, 2
        %s779 = scalar_select %p778, %s40, 2
        %s780 = scalar_lea.vmem %s3, %s779
        %p781 = pneg %p146
        %p782 = pneg %p143
        %p783 = scmp.lt.s32.totalorder %s40, 2
        %s784 = scalar_select %p783, %s40, 2
        %s785 = smul.addr %s784, 4
        %s786 = smul.addr %s785, 8
        %s787 = scalar_lea.vmem %s4, %s786
        %p788 = pneg %p172
        %p789 = pneg %p169
        %p790 = scmp.lt.s32.totalorder %s40, 2
        %s791 = scalar_select %p790, %s40, 2
        %s792 = scalar_lea.vmem %s5, %s791
        %p793 = pneg %p198
        %p794 = pneg %p195
        %p795 = scmp.lt.s32.totalorder %s40, 2
        %s796 = scalar_select %p795, %s40, 2
        %s797 = scalar_lea.vmem %s6, %s796
        %p798 = pneg %p224
        %p799 = pneg %p221
        %p800 = scmp.lt.s32.totalorder %s40, 2
        %s801 = scalar_select %p800, %s40, 2
        %s802 = scalar_lea.vmem %s7, %s801
        %p803 = pneg %p250
        %p804 = pneg %p247
        %p805 = scmp.lt.s32.totalorder %s40, 2
        %s806 = scalar_select %p805, %s40, 2
        %s807 = smul.addr %s806, 4
        %s808 = smul.addr %s807, 8
        %s809 = scalar_lea.vmem %s8, %s808
        %p810 = pneg %p276
        %p811 = pneg %p273
        %p812 = scmp.lt.s32.totalorder %s40, 2
        %s813 = scalar_select %p812, %s40, 2
        %s814 = scalar_lea.vmem %s9, %s813
        %p815 = pneg %p302
        %p816 = pneg %p299
        %p817 = scmp.lt.s32.totalorder %s40, 2
        %s818 = scalar_select %p817, %s40, 2
        %s819 = smul.addr %s818, 8
        %s820 = smul.addr %s819, 8
        %s821 = scalar_lea.vmem %s10, %s820
        %p822 = pneg %p328
        %p823 = pneg %p325
        %p824 = scmp.lt.s32.totalorder %s40, 2
        %s825 = scalar_select %p824, %s40, 2
        %s826 = scalar_lea.vmem %s11, %s825
        %p827 = pneg %p354
        %p828 = pneg %p351
        %p829 = scmp.lt.s32.totalorder %s40, 2
        %s830 = scalar_select %p829, %s40, 2
        %s831 = scalar_lea.vmem %s12, %s830
        %p832 = pneg %p380
        %p833 = pneg %p377
        %p834 = scmp.lt.s32.totalorder %s40, 2
        %s835 = scalar_select %p834, %s40, 2
        %s836 = scalar_lea.vmem %s13, %s835
        %p837 = pneg %p406
        %p838 = pneg %p403
        %p839 = scmp.lt.s32.totalorder %s40, 2
        %s840 = scalar_select %p839, %s40, 2
        %s841 = smul.addr %s840, 2
        %s842 = smul.addr %s841, 8
        %s843 = scalar_lea.vmem %s14, %s842
        %p844 = pneg %p432
        %p845 = pneg %p429
        %p846 = scmp.lt.s32.totalorder %s40, 2
        %s847 = scalar_select %p846, %s40, 2
        %s848 = smul.addr %s847, 2
        %s849 = smul.addr %s848, 8
        %s850 = scalar_lea.vmem %s15, %s849
        %p851 = pneg %p458
        %p852 = pneg %p455
        %p853 = scmp.lt.s32.totalorder %s40, 2
        %s854 = scalar_select %p853, %s40, 2
        %s855 = smul.addr %s854, 2
        %s856 = smul.addr %s855, 8
        %s857 = scalar_lea.vmem %s16, %s856
        %p858 = pneg %p484
        %p859 = pneg %p481
        %p860 = scmp.lt.s32.totalorder %s40, 2
        %s861 = scalar_select %p860, %s40, 2
        %s862 = smul.addr %s861, 8
        %s863 = scalar_lea.vmem %s17, %s862
        %p864 = pneg %p510
        %p865 = pneg %p507
        %p866 = pneg %p531
        %p867 = pneg %p528
        %p868 = pneg %p552
        %p869 = pneg %p549
        %p870 = pneg %p573
        %p871 = pneg %p570
        %p872 = pneg %p599
        %p873 = pneg %p596
        %s874 = sand.u32 %s586, 1
        %s875 = scalar_lea.sflag [#allocation5], %s874
        %s876 = sand.u32 %s586, 1
        %s877 = smul.addr %s876, 8
        %s878 = scalar_lea.vmem [#allocation4], %s877
        %p879 = scmp.lt.s32.totalorder %s39, 1
        %s880 = scalar_select %p879, %s39, 1
        %s881 = smul.addr %s880, 8
        %s882 = scalar_lea.vmem %s0, %s881
        %p883 = scmp.lt.s32.totalorder %s39, 1
        %s884 = scalar_select %p883, %s39, 1
        %s885 = smul.addr %s884, 8
        %s886 = scalar_lea.vmem %s1, %s885
        %p887 = scmp.lt.s32.totalorder %s40, 2
        %s888 = scalar_select %p887, %s40, 2
        %s889 = smul.addr %s888, 4
        %s890 = smul.addr %s889, 8
        %s891 = scalar_lea.vmem %s2, %s890
        %p892 = scmp.lt.s32.totalorder %s40, 2
        %s893 = scalar_select %p892, %s40, 2
        %s894 = scalar_lea.vmem %s3, %s893
        %p895 = scmp.lt.s32.totalorder %s40, 2
        %s896 = scalar_select %p895, %s40, 2
        %s897 = smul.addr %s896, 4
        %s898 = smul.addr %s897, 8
        %s899 = scalar_lea.vmem %s4, %s898
        %p900 = scmp.lt.s32.totalorder %s40, 2
        %s901 = scalar_select %p900, %s40, 2
        %s902 = scalar_lea.vmem %s5, %s901
        %p903 = scmp.lt.s32.totalorder %s40, 2
        %s904 = scalar_select %p903, %s40, 2
        %s905 = scalar_lea.vmem %s6, %s904
        %p906 = scmp.lt.s32.totalorder %s40, 2
        %s907 = scalar_select %p906, %s40, 2
        %s908 = scalar_lea.vmem %s7, %s907
        %p909 = scmp.lt.s32.totalorder %s40, 2
        %s910 = scalar_select %p909, %s40, 2
        %s911 = smul.addr %s910, 4
        %s912 = smul.addr %s911, 8
        %s913 = scalar_lea.vmem %s8, %s912
        %p914 = scmp.lt.s32.totalorder %s40, 2
        %s915 = scalar_select %p914, %s40, 2
        %s916 = scalar_lea.vmem %s9, %s915
        %p917 = scmp.lt.s32.totalorder %s40, 2
        %s918 = scalar_select %p917, %s40, 2
        %s919 = smul.addr %s918, 8
        %s920 = smul.addr %s919, 8
        %s921 = scalar_lea.vmem %s10, %s920
        %p922 = scmp.lt.s32.totalorder %s40, 2
        %s923 = scalar_select %p922, %s40, 2
        %s924 = scalar_lea.vmem %s11, %s923
        %p925 = scmp.lt.s32.totalorder %s40, 2
        %s926 = scalar_select %p925, %s40, 2
        %s927 = scalar_lea.vmem %s12, %s926
        %p928 = scmp.lt.s32.totalorder %s40, 2
        %s929 = scalar_select %p928, %s40, 2
        %s930 = scalar_lea.vmem %s13, %s929
        %p931 = scmp.lt.s32.totalorder %s40, 2
        %s932 = scalar_select %p931, %s40, 2
        %s933 = smul.addr %s932, 2
        %s934 = smul.addr %s933, 8
        %s935 = scalar_lea.vmem %s14, %s934
        %p936 = scmp.lt.s32.totalorder %s40, 2
        %s937 = scalar_select %p936, %s40, 2
        %s938 = smul.addr %s937, 2
        %s939 = smul.addr %s938, 8
        %s940 = scalar_lea.vmem %s15, %s939
        %p941 = scmp.lt.s32.totalorder %s40, 2
        %s942 = scalar_select %p941, %s40, 2
        %s943 = smul.addr %s942, 2
        %s944 = smul.addr %s943, 8
        %s945 = scalar_lea.vmem %s16, %s944
        %p946 = scmp.lt.s32.totalorder %s40, 2
        %s947 = scalar_select %p946, %s40, 2
        %s948 = smul.addr %s947, 8
        %s949 = scalar_lea.vmem %s17, %s948
        %p950 = scmp.eq.s32.totalorder %s40, 0
        // Predicated region
        $region105: #{architecture_forward.1} parent=103 // pred_check
          %p951 = pneg %p950
        $region106: #{architecture_forward.1} parent=103 // pred_check_branch
          %953 = sbr.rel (%p951) target = $region108
        $region107: #{architecture_forward.1} parent=103 // pred_region
          %v954 = vld [vmem:[%s882] sm:$0xff]
          %vm955 = vcmask 261120
          %956 = vst.msk [vmem:[#allocation2] sm:$0xff] %vm955, %v954
          %v957 = vld [vmem:[%s886] sm:$0xff]
          %958 = vst.msk [vmem:[#allocation3] sm:$0xff] %vm955, %v957
        $region108: #{architecture_forward.1} parent=103 // pred_fallthru
          _
        %p959 = scmp.lt.s32.totalorder %s40, 1
        %p960 = scmp.ge.s32.totalorder %s40, 1
        %s961 = ssub.s32 %s40, 1
        %s962 = sand.u32 %s961, 1
        %p963 = scmp.eq.s32.totalorder %s962, 0
        %p964 = pnand %p960, %p963
        %p965 = pneg %p964
        %v966 = vld [vmem:[#allocation2] sm:$0xff]
        %v967 = vld [vmem:[#allocation3] sm:$0xff]
        %s968 = scalar_select %p959, 1, 0
        %v969 = vstv %s968
        %vm970 = vcmp.eq.s32.totalorder %v969, 1
        %v971 = vsel %vm970, %v966, %v967
        %s972 = scalar_select %p965, 1, 0
        %v973 = vstv %s972
        %vm974 = vcmp.eq.s32.totalorder %v973, 1
        %v975 = vsel %vm974, %v967, %v966
        %v976 = vld [vmem:[%s891] sm:$0xff]
        %v977 = vld [vmem:[%s891 + $0x8] sm:$0xff]
        %v978 = vld [vmem:[%s891 + $0x10] sm:$0xff]
        %v979 = vld [vmem:[%s891 + $0x18] sm:$0xff]
        %v980 = vld [vmem:[%s894] sm:$0x1]
        %v982 = vperm.slane %v980, 0
        %vm984 = vcmask 261120
        %v986 = vsel %vm984, %v971, 0
        %v989 = vsel %vm984, %v975, 0
        %991 = vmatpush.msra.mxu0 0.0
        %992 = vmatpush.msra.mxu0 0.0
        %993 = vmatpush.msra.mxu0 0.0
        %994 = vmatpush.msra.mxu0 0.0
        %995 = vmatpush.msra.mxu0 0.0
        %996 = vmatpush.msra.mxu0 0.0
        %997 = vmatpush.msra.mxu0 0.0
        %998 = vmatpush.msra.mxu0 0.0
        %999 = vmatpush.msra.mxu0 0.0
        %1000 = vmatpush.msra.mxu0 0.0
        %1001 = vmatpush.msra.mxu0 0.0
        %1002 = vmatpush.msra.mxu0 0.0
        %1003 = vmatpush.msra.mxu0 %v979
        %1004 = vmatpush.msra.mxu0 %v978
        %1005 = vmatpush.msra.mxu0 %v977
        %1006 = vmatpush.msra.mxu0 %v976
        %1007 = vmatmul.f32.gmra.mxu0 %v986
        %v1008 = vpop.f32.mrf.mxu0
        %v1009 = vadd.f32 %v982, %v1008
        %1010 = vmatmul.f32.gmra.mxu0 %v989
        %v1011 = vpop.f32.mrf.mxu0
        %v1012 = vadd.f32 %v982, %v1011
        %1013 = vdwg.mxu0
        %v1014 = vld [vmem:[%s20] sm:$0x1]
        %v1015 = vld [vmem:[%s20 + $0x1] sm:$0x1]
        %v1018 = vperm.slane %v1014, 0
        %v1019 = vperm.slane %v1015, 0
        %v1022 = vmul.f32 %v1009, %v1018
        %v1023 = vmul.f32 %v1009, %v1019
        %v1025 = vsel %vm984, %v1022, 0
        %v1028 = vsel %vm984, %v1009, 0
        %1030 = vmatpush.xpose.msra.mxu0 0.0
        %1031 = vmatpush.xpose.msra.mxu0 0.0
        %1032 = vmatpush.xpose.msra.mxu0 0.0
        %1033 = vmatpush.xpose.msra.mxu0 0.0
        %1034 = vmatpush.xpose.msra.mxu0 0.0
        %1035 = vmatpush.xpose.msra.mxu0 0.0
        %1036 = vmatpush.xpose.msra.mxu0 0.0
        %1037 = vmatpush.xpose.msra.mxu0 0.0
        %1038 = vmatpush.xpose.msra.mxu0 0.0
        %1039 = vmatpush.xpose.msra.mxu0 0.0
        %1040 = vmatpush.xpose.msra.mxu0 0.0
        %1041 = vmatpush.xpose.msra.mxu0 0.0
        %1042 = vmatpush.xpose.msra.mxu0 0.0
        %1043 = vmatpush.xpose.msra.mxu0 0.0
        %1044 = vmatpush.xpose.msra.mxu0 0.0
        %1045 = vmatpush.xpose.msra.mxu0 %v1028
        %1046 = vmatmul.f32.gmra.mxu0 %v1025
        %v1047 = vpop.f32.mrf.mxu0
        %v1048 = vadd.f32 0.0, %v1047
        %1049 = vdwg.mxu0
        %v1051 = vsel %vm984, %v1023, 0
        %1053 = vmatpush.xpose.msra.mxu0 0.0
        %1054 = vmatpush.xpose.msra.mxu0 0.0
        %1055 = vmatpush.xpose.msra.mxu0 0.0
        %1056 = vmatpush.xpose.msra.mxu0 0.0
        %1057 = vmatpush.xpose.msra.mxu0 0.0
        %1058 = vmatpush.xpose.msra.mxu0 0.0
        %1059 = vmatpush.xpose.msra.mxu0 0.0
        %1060 = vmatpush.xpose.msra.mxu0 0.0
        %1061 = vmatpush.xpose.msra.mxu0 0.0
        %1062 = vmatpush.xpose.msra.mxu0 0.0
        %1063 = vmatpush.xpose.msra.mxu0 0.0
        %1064 = vmatpush.xpose.msra.mxu0 0.0
        %1065 = vmatpush.xpose.msra.mxu0 0.0
        %1066 = vmatpush.xpose.msra.mxu0 0.0
        %1067 = vmatpush.xpose.msra.mxu0 0.0
        %1068 = vmatpush.xpose.msra.mxu0 %v1028
        %1069 = vmatmul.f32.gmra.mxu0 %v1051
        %v1070 = vpop.f32.mrf.mxu0
        %v1071 = vadd.f32 0.0, %v1070
        %1072 = vdwg.mxu0
        %v1073 = vmul.f32 %v1048, 0.25
        %v1074 = vmul.f32 %v1071, 0.25
        %v1075 = vld [vmem:[%s935] sm:$0xff]
        %v1076 = vld [vmem:[%s935 + $0x8] sm:$0xff]
        %v1077 = vld [vmem:[%s940] sm:$0xff]
        %v1078 = vld [vmem:[%s940 + $0x8] sm:$0xff]
        %v1079 = vld [vmem:[%s945] sm:$0xff]
        %v1080 = vld [vmem:[%s945 + $0x8] sm:$0xff]
        %v1081 = vld [vmem:[%s18] sm:$0xff]
        %v1082 = vld [vmem:[%s19] sm:$0xff]
        %vm1083 = vcmp.gt.f32.partialorder %v1075, 0.0
        %vm1084 = vcmp.gt.f32.partialorder %v1076, 0.0
        %v1085 = vsel %vm1083, %v1073, -1e+32
        %v1086 = vsel %vm1084, %v1074, -1e+32
        %vm1087 = vcmask 64512
        %v1088 = vsel %vm1087, %v1085, -inf
        %1089 = vmax.xlane.f32.xlu0 %v1088
        %v1090 = vpop.xlane.xlu0 %1089
        %v1091 = vsel %vm1087, %v1086, -inf
        %1092 = vmax.xlane.f32.xlu0 %v1091
        %v1093 = vpop.xlane.xlu0 %1092
        %v1094 = vsub.f32 %v1085, %v1090
        %v1095 = vsub.f32 %v1086, %v1093
        %v1096 = vmul.f32 %v1094, 1.442695
        %v1097 = vpow.pop %v1096
        %v1098 = vmul.f32 %v1095, 1.442695
        %v1099 = vpow.pop %v1098
        %v1100 = vsel %vm1087, %v1097, 0.0
        %1101 = vadd.xlane.f32.xlu0 %v1100
        %v1102 = vpop.xlane.xlu0 %1101
        %v1103 = vsel %vm1087, %v1099, 0.0
        %1104 = vadd.xlane.f32.xlu0 %v1103
        %v1105 = vpop.xlane.xlu0 %1104
        %v1106 = vrcp.pop %v1102
        %v1107 = vmul.f32 %v1102, %v1106
        %v1108 = vsub.f32 1.0, %v1107
        %v1109 = vmul.f32 %v1106, %v1108
        %v1110 = vadd.f32 %v1106, %v1109
        %vm1111 = vweird.f32 %v1102
        %vm1112 = vweird.f32 %v1106
        %vm1113 = vmor %vm1111, %vm1112
        %v1114 = vsel %vm1113, %v1106, %v1110
        %v1115 = vand.u32 2147483647, %v1102
        %vm1116 = vcmp.eq.f32.partialorder %v1115, 8.507059e+37
        %v1117 = vand.u32 %v1102, 2147483648
        %v1118 = vor.u32 1.1754944e-38, %v1117
        %v1119 = vsel %vm1116, %v1118, %v1114
        %v1120 = vmul.f32 %v1097, %v1119
        %v1121 = vrcp.pop %v1105
        %v1122 = vmul.f32 %v1105, %v1121
        %v1123 = vsub.f32 1.0, %v1122
        %v1124 = vmul.f32 %v1121, %v1123
        %v1125 = vadd.f32 %v1121, %v1124
        %vm1126 = vweird.f32 %v1105
        %vm1127 = vweird.f32 %v1121
        %vm1128 = vmor %vm1126, %vm1127
        %v1129 = vsel %vm1128, %v1121, %v1125
        %v1130 = vand.u32 2147483647, %v1105
        %vm1131 = vcmp.eq.f32.partialorder %v1130, 8.507059e+37
        %v1132 = vand.u32 %v1105, 2147483648
        %v1133 = vor.u32 1.1754944e-38, %v1132
        %v1134 = vsel %vm1131, %v1133, %v1129
        %v1135 = vmul.f32 %v1099, %v1134
        %v1136 = vmul.f32 %v1120, %v1077
        %v1137 = vmul.f32 %v1135, %v1078
        %v1139 = vsel %vm1087, %v1136, 0
        %v1142 = vsel %vm1087, %v1137, 0
        %1144 = vmatpush.msra.mxu0 0.0
        %1145 = vmatpush.msra.mxu0 0.0
        %1146 = vmatpush.msra.mxu0 0.0
        %1147 = vmatpush.msra.mxu0 0.0
        %1148 = vmatpush.msra.mxu0 0.0
        %1149 = vmatpush.msra.mxu0 0.0
        %1150 = vmatpush.msra.mxu0 0.0
        %1151 = vmatpush.msra.mxu0 0.0
        %1152 = vmatpush.msra.mxu0 0.0
        %1153 = vmatpush.msra.mxu0 0.0
        %1154 = vmatpush.msra.mxu0 0.0
        %1155 = vmatpush.msra.mxu0 0.0
        %1156 = vmatpush.msra.mxu0 0.0
        %1157 = vmatpush.msra.mxu0 0.0
        %1158 = vmatpush.msra.mxu0 0.0
        %1159 = vmatpush.msra.mxu0 %v1081
        %1160 = vmatmul.f32.gmra.mxu0 %v1139
        %v1161 = vpop.f32.mrf.mxu0
        %v1162 = vadd.f32 0.0, %v1161
        %1163 = vmatmul.f32.gmra.mxu0 %v1142
        %v1164 = vpop.f32.mrf.mxu0
        %v1165 = vadd.f32 0.0, %v1164
        %1166 = vdwg.mxu0
        %v1167 = vsel %vm1087, %v1136, 0.0
        %1168 = vadd.xlane.f32.xlu0 %v1167
        %v1169 = vpop.xlane.xlu0 %1168
        %v1170 = vsel %vm1087, %v1137, 0.0
        %1171 = vadd.xlane.f32.xlu0 %v1170
        %v1172 = vpop.xlane.xlu0 %1171
        %v1173 = vsub.f32 %v1169, %v1162
        %v1174 = vsub.f32 %v1172, %v1165
        %v1175 = vmul.f32 %v1173, %v1082
        %v1176 = vmul.f32 %v1174, %v1082
        %v1177 = vmax.f32 %v1175, 0.0
        %v1178 = vmax.f32 %v1176, 0.0
        %v1179 = vrsqrt.pop %v1177
        %v1180 = vmul.f32 %v1179, %v1177
        %v1181 = vmul.f32 %v1180, %v1179
        %v1182 = vmul.f32 0.5, %v1181
        %v1183 = vsub.f32 1.5, %v1182
        %v1184 = vmul.f32 %v1179, %v1183
        %v1185 = vmul.f32 %v1177, %v1184
        %vm1186 = vcmp.eq.f32.partialorder %v1177, inf
        %v1187 = vsel %vm1186, %v1177, %v1185
        %vm1188 = vcmp.eq.f32.partialorder %v1177, 0.0
        %v1189 = vand.u32 %v1177, 2147483648
        %v1190 = vsel %vm1188, %v1189, %v1187
        %v1191 = vrsqrt.pop %v1178
        %v1192 = vmul.f32 %v1191, %v1178
        %v1193 = vmul.f32 %v1192, %v1191
        %v1194 = vmul.f32 0.5, %v1193
        %v1195 = vsub.f32 1.5, %v1194
        %v1196 = vmul.f32 %v1191, %v1195
        %v1197 = vmul.f32 %v1178, %v1196
        %vm1198 = vcmp.eq.f32.partialorder %v1178, inf
        %v1199 = vsel %vm1198, %v1178, %v1197
        %vm1200 = vcmp.eq.f32.partialorder %v1178, 0.0
        %v1201 = vand.u32 %v1178, 2147483648
        %v1202 = vsel %vm1200, %v1201, %v1199
        %v1203 = vmul.f32 %v1190, %v1079
        %v1204 = vmul.f32 %v1202, %v1080
        %v1205 = vmul.f32 %v1203, 1.442695
        %v1206 = vpow.pop %v1205
        %v1207 = vmul.f32 %v1204, 1.442695
        %v1208 = vpow.pop %v1207
        %v1209 = vmax.f32 %v1206, 1e-05
        %v1210 = vmax.f32 %v1208, 1e-05
        %v1211 = vmin.f32 %v1209, 100000.0
        %v1212 = vmin.f32 %v1210, 100000.0
        %vm1213 = vcmp.gt.f32.partialorder %v1077, 0.0
        %vm1214 = vcmp.gt.f32.partialorder %v1078, 0.0
        %v1215 = vmul.f32 %v1073, %v1211
        %v1216 = vmul.f32 %v1074, %v1212
        %v1217 = vsel %vm1213, %v1215, -1e+32
        %v1218 = vsel %vm1214, %v1216, -1e+32
        %v1219 = vsel %vm1087, %v1217, -inf
        %1220 = vmax.xlane.f32.xlu0 %v1219
        %v1221 = vpop.xlane.xlu0 %1220
        %v1222 = vsel %vm1087, %v1218, -inf
        %1223 = vmax.xlane.f32.xlu0 %v1222
        %v1224 = vpop.xlane.xlu0 %1223
        %v1225 = vsub.f32 %v1217, %v1221
        %v1226 = vsub.f32 %v1218, %v1224
        %v1227 = vmul.f32 %v1225, 1.442695
        %v1228 = vpow.pop %v1227
        %v1229 = vmul.f32 %v1226, 1.442695
        %v1230 = vpow.pop %v1229
        %v1231 = vsel %vm1087, %v1228, 0.0
        %1232 = vadd.xlane.f32.xlu0 %v1231
        %v1233 = vpop.xlane.xlu0 %1232
        %v1234 = vsel %vm1087, %v1230, 0.0
        %1235 = vadd.xlane.f32.xlu0 %v1234
        %v1236 = vpop.xlane.xlu0 %1235
        %v1237 = vrcp.pop %v1233
        %v1238 = vmul.f32 %v1233, %v1237
        %v1239 = vsub.f32 1.0, %v1238
        %v1240 = vmul.f32 %v1237, %v1239
        %v1241 = vadd.f32 %v1237, %v1240
        %vm1242 = vweird.f32 %v1233
        %vm1243 = vweird.f32 %v1237
        %vm1244 = vmor %vm1242, %vm1243
        %v1245 = vsel %vm1244, %v1237, %v1241
        %v1246 = vand.u32 2147483647, %v1233
        %vm1247 = vcmp.eq.f32.partialorder %v1246, 8.507059e+37
        %v1248 = vand.u32 %v1233, 2147483648
        %v1249 = vor.u32 1.1754944e-38, %v1248
        %v1250 = vsel %vm1247, %v1249, %v1245
        %v1251 = vmul.f32 %v1228, %v1250
        %v1252 = vrcp.pop %v1236
        %v1253 = vmul.f32 %v1236, %v1252
        %v1254 = vsub.f32 1.0, %v1253
        %v1255 = vmul.f32 %v1252, %v1254
        %v1256 = vadd.f32 %v1252, %v1255
        %vm1257 = vweird.f32 %v1236
        %vm1258 = vweird.f32 %v1252
        %vm1259 = vmor %vm1257, %vm1258
        %v1260 = vsel %vm1259, %v1252, %v1256
        %v1261 = vand.u32 2147483647, %v1236
        %vm1262 = vcmp.eq.f32.partialorder %v1261, 8.507059e+37
        %v1263 = vand.u32 %v1236, 2147483648
        %v1264 = vor.u32 1.1754944e-38, %v1263
        %v1265 = vsel %vm1262, %v1264, %v1260
        %v1266 = vmul.f32 %v1230, %v1265
        %v1267 = vld [vmem:[%s949] sm:$0xff]
        %v1268 = vmul.f32 %v1251, %v1267
        %v1269 = vmul.f32 %v1266, %v1267
        %1271 = vrot.lane.b32.xlu0 %v1012, 96
        %v1272 = vpop.permute.xlu0 %1271
        %v1275 = vsel %vm1087, %v1268, 0
        %1277 = vmatpush.msra.mxu0 0.0
        %1278 = vmatpush.msra.mxu0 0.0
        %1279 = vmatpush.msra.mxu0 0.0
        %1280 = vmatpush.msra.mxu0 0.0
        %1281 = vmatpush.msra.mxu0 0.0
        %1282 = vmatpush.msra.mxu0 0.0
        %1283 = vmatpush.msra.mxu0 0.0
        %1284 = vmatpush.msra.mxu0 0.0
        %1285 = vmatpush.msra.mxu0 0.0
        %1286 = vmatpush.msra.mxu0 0.0
        %1287 = vmatpush.msra.mxu0 0.0
        %1288 = vmatpush.msra.mxu0 0.0
        %1289 = vmatpush.msra.mxu0 0.0
        %1290 = vmatpush.msra.mxu0 0.0
        %1291 = vmatpush.msra.mxu0 0.0
        %1292 = vmatpush.msra.mxu0 %v1272
        %1293 = vmatmul.f32.gmra.mxu0 %v1275
        %v1294 = vpop.f32.mrf.mxu0
        %v1295 = vadd.f32 0.0, %v1294
        %1296 = vdwg.mxu0
        %v1298 = vsel %vm1087, %v1269, 0
        %1300 = vmatpush.msra.mxu0 0.0
        %1301 = vmatpush.msra.mxu0 0.0
        %1302 = vmatpush.msra.mxu0 0.0
        %1303 = vmatpush.msra.mxu0 0.0
        %1304 = vmatpush.msra.mxu0 0.0
        %1305 = vmatpush.msra.mxu0 0.0
        %1306 = vmatpush.msra.mxu0 0.0
        %1307 = vmatpush.msra.mxu0 0.0
        %1308 = vmatpush.msra.mxu0 0.0
        %1309 = vmatpush.msra.mxu0 0.0
        %1310 = vmatpush.msra.mxu0 0.0
        %1311 = vmatpush.msra.mxu0 0.0
        %1312 = vmatpush.msra.mxu0 0.0
        %1313 = vmatpush.msra.mxu0 0.0
        %1314 = vmatpush.msra.mxu0 0.0
        %1315 = vmatpush.msra.mxu0 %v1272
        %1316 = vmatmul.f32.gmra.mxu0 %v1298
        %v1317 = vpop.f32.mrf.mxu0
        %v1318 = vadd.f32 0.0, %v1317
        %1319 = vdwg.mxu0
        %v1320 = vmul.f32 %v1295, %v1018
        %v1321 = vmul.f32 %v1318, %v1019
        %v1322 = vsel %vm984, %v1320, 0.0
        %v1323 = vsel %vm984, %v1321, 0.0
        %v1324 = vadd.f32 %v1322, %v1323
        %v1325 = vld [vmem:[%s899] sm:$0xff]
        %v1326 = vld [vmem:[%s899 + $0x8] sm:$0xff]
        %v1327 = vld [vmem:[%s899 + $0x10] sm:$0xff]
        %v1328 = vld [vmem:[%s899 + $0x18] sm:$0xff]
        %v1329 = vld [vmem:[%s902] sm:$0x1]
        %v1331 = vperm.slane %v1329, 0
        %v1334 = vsel %vm984, %v1324, 0
        %1336 = vmatpush.msra.mxu0 0.0
        %1337 = vmatpush.msra.mxu0 0.0
        %1338 = vmatpush.msra.mxu0 0.0
        %1339 = vmatpush.msra.mxu0 0.0
        %1340 = vmatpush.msra.mxu0 0.0
        %1341 = vmatpush.msra.mxu0 0.0
        %1342 = vmatpush.msra.mxu0 0.0
        %1343 = vmatpush.msra.mxu0 0.0
        %1344 = vmatpush.msra.mxu0 0.0
        %1345 = vmatpush.msra.mxu0 0.0
        %1346 = vmatpush.msra.mxu0 0.0
        %1347 = vmatpush.msra.mxu0 0.0
        %1348 = vmatpush.msra.mxu0 %v1328
        %1349 = vmatpush.msra.mxu0 %v1327
        %1350 = vmatpush.msra.mxu0 %v1326
        %1351 = vmatpush.msra.mxu0 %v1325
        %1352 = vmatmul.f32.gmra.mxu0 %v1334
        %v1353 = vpop.f32.mrf.mxu0
        %v1354 = vadd.f32 %v1331, %v1353
        %1355 = vdwg.mxu0
        %v1356 = vadd.f32 %v971, %v1354
        %v1357 = vsel %vm984, %v1356, 0.0
        %1358 = vadd.xlane.f32.xlu0 %v1357
        %v1359 = vpop.xlane.xlu0 %1358
        %v1360 = vrcp.pop 32.0
        %v1361 = vmul.f32 32.0, %v1360
        %v1362 = vsub.f32 1.0, %v1361
        %v1363 = vmul.f32 %v1360, %v1362
        %v1364 = vadd.f32 %v1360, %v1363
        %vm1365 = vweird.f32 %v1360
        %v1366 = vsel %vm1365, %v1360, %v1364
        %v1367 = vmul.f32 %v1359, %v1366
        %v1368 = vsub.f32 %v1356, %v1367
        %v1369 = vmul.f32 %v1368, %v1368
        %v1370 = vsel %vm984, %v1369, 0.0
        %1371 = vadd.xlane.f32.xlu0 %v1370
        %v1372 = vpop.xlane.xlu0 %1371
        %v1373 = vmul.f32 %v1372, %v1366
        %v1374 = vadd.f32 %v1373, 1e-05
        %v1375 = vrsqrt.pop %v1374
        %v1376 = vmul.f32 %v1375, %v1374
        %v1377 = vmul.f32 %v1376, %v1375
        %v1378 = vmul.f32 0.5, %v1377
        %v1379 = vsub.f32 1.5, %v1378
        %v1380 = vmul.f32 %v1375, %v1379
        %vm1381 = vweird.f32 %v1374
        %vm1382 = vweird.f32 %v1375
        %vm1383 = vmor %vm1381, %vm1382
        %v1384 = vsel %vm1383, %v1375, %v1380
        %v1385 = vmul.f32 %v1368, %v1384
        %v1386 = vld [vmem:[%s905] sm:$0x1]
        %v1388 = vperm.slane %v1386, 0
        %v1390 = vmul.f32 %v1385, %v1388
        %v1391 = vld [vmem:[%s908] sm:$0x1]
        %v1393 = vperm.slane %v1391, 0
        %v1395 = vadd.f32 %v1390, %v1393
        %v1396 = vld [vmem:[%s913] sm:$0xff]
        %v1397 = vld [vmem:[%s913 + $0x8] sm:$0xff]
        %v1398 = vld [vmem:[%s913 + $0x10] sm:$0xff]
        %v1399 = vld [vmem:[%s913 + $0x18] sm:$0xff]
        %v1400 = vld [vmem:[%s916] sm:$0x1]
        %v1402 = vperm.slane %v1400, 0
        %v1405 = vsel %vm984, %v1395, 0
        %1407 = vmatpush.msra.mxu0 0.0
        %1408 = vmatpush.msra.mxu0 0.0
        %1409 = vmatpush.msra.mxu0 0.0
        %1410 = vmatpush.msra.mxu0 0.0
        %1411 = vmatpush.msra.mxu0 0.0
        %1412 = vmatpush.msra.mxu0 0.0
        %1413 = vmatpush.msra.mxu0 0.0
        %1414 = vmatpush.msra.mxu0 0.0
        %1415 = vmatpush.msra.mxu0 0.0
        %1416 = vmatpush.msra.mxu0 0.0
        %1417 = vmatpush.msra.mxu0 0.0
        %1418 = vmatpush.msra.mxu0 0.0
        %1419 = vmatpush.msra.mxu0 %v1399
        %1420 = vmatpush.msra.mxu0 %v1398
        %1421 = vmatpush.msra.mxu0 %v1397
        %1422 = vmatpush.msra.mxu0 %v1396
        %1423 = vmatmul.f32.gmra.mxu0 %v1405
        %v1424 = vpop.f32.mrf.mxu0
        %v1425 = vadd.f32 %v1402, %v1424
        %1426 = vdwg.mxu0
        %v1427 = vmax.f32 %v1425, 0.0
        %v1428 = vld [vmem:[%s921] sm:$0xff]
        %v1429 = vld [vmem:[%s921 + $0x8] sm:$0xff]
        %v1430 = vld [vmem:[%s921 + $0x10] sm:$0xff]
        %v1431 = vld [vmem:[%s921 + $0x18] sm:$0xff]
        %v1432 = vld [vmem:[%s921 + $0x20] sm:$0xff]
        %v1433 = vld [vmem:[%s921 + $0x28] sm:$0xff]
        %v1434 = vld [vmem:[%s921 + $0x30] sm:$0xff]
        %v1435 = vld [vmem:[%s921 + $0x38] sm:$0xff]
        %v1436 = vld [vmem:[%s924] sm:$0x1]
        %v1438 = vperm.slane %v1436, 0
        %vm1440 = vcmask 523264
        %v1442 = vsel %vm1440, %v1427, 0
        %1444 = vmatpush.msra.mxu0 0.0
        %1445 = vmatpush.msra.mxu0 0.0
        %1446 = vmatpush.msra.mxu0 0.0
        %1447 = vmatpush.msra.mxu0 0.0
        %1448 = vmatpush.msra.mxu0 0.0
        %1449 = vmatpush.msra.mxu0 0.0
        %1450 = vmatpush.msra.mxu0 0.0
        %1451 = vmatpush.msra.mxu0 0.0
        %1452 = vmatpush.msra.mxu0 %v1435
        %1453 = vmatpush.msra.mxu0 %v1434
        %1454 = vmatpush.msra.mxu0 %v1433
        %1455 = vmatpush.msra.mxu0 %v1432
        %1456 = vmatpush.msra.mxu0 %v1431
        %1457 = vmatpush.msra.mxu0 %v1430
        %1458 = vmatpush.msra.mxu0 %v1429
        %1459 = vmatpush.msra.mxu0 %v1428
        %1460 = vmatmul.f32.gmra.mxu0 %v1442
        %v1461 = vpop.f32.mrf.mxu0
        %v1462 = vadd.f32 %v1438, %v1461
        %1463 = vdwg.mxu0
        %v1464 = vadd.f32 %v1395, %v1462
        %v1465 = vsel %vm984, %v1464, 0.0
        %1466 = vadd.xlane.f32.xlu0 %v1465
        %v1467 = vpop.xlane.xlu0 %1466
        %v1468 = vmul.f32 %v1467, %v1366
        %v1469 = vsub.f32 %v1464, %v1468
        %v1470 = vmul.f32 %v1469, %v1469
        %v1471 = vsel %vm984, %v1470, 0.0
        %1472 = vadd.xlane.f32.xlu0 %v1471
        %v1473 = vpop.xlane.xlu0 %1472
        %v1474 = vmul.f32 %v1473, %v1366
        %v1475 = vadd.f32 %v1474, 1e-05
        %v1476 = vrsqrt.pop %v1475
        %v1477 = vmul.f32 %v1476, %v1475
        %v1478 = vmul.f32 %v1477, %v1476
        %v1479 = vmul.f32 0.5, %v1478
        %v1480 = vsub.f32 1.5, %v1479
        %v1481 = vmul.f32 %v1476, %v1480
        %vm1482 = vweird.f32 %v1475
        %vm1483 = vweird.f32 %v1476
        %vm1484 = vmor %vm1482, %vm1483
        %v1485 = vsel %vm1484, %v1476, %v1481
        %v1486 = vmul.f32 %v1469, %v1485
        %v1487 = vld [vmem:[%s927] sm:$0x1]
        %v1489 = vperm.slane %v1487, 0
        %v1491 = vmul.f32 %v1486, %v1489
        %v1492 = vld [vmem:[%s930] sm:$0x1]
        %v1494 = vperm.slane %v1492, 0
        %v1496 = vadd.f32 %v1491, %v1494
        %v1497 = vsel %vm974, %v1395, %v1496
        // Predicated region
        $region109: #{architecture_forward.1} parent=103 // pred_check
          %p1498 = pneg %p959
        $region110: #{architecture_forward.1} parent=103 // pred_check_branch
          %1500 = sbr.rel (%p1498) target = $region112
        $region111: #{architecture_forward.1} parent=103 // pred_region
          %1501 = vst.msk [vmem:[#allocation2] sm:$0xff] %vm984, %v1497
        $region112: #{architecture_forward.1} parent=103 // pred_fallthru
          _
        // Predicated region
        $region113: #{architecture_forward.1} parent=103 // pred_check
          %p1502 = pneg %p960
        $region114: #{architecture_forward.1} parent=103 // pred_check_branch
          %1504 = sbr.rel (%p1502) target = $region116
        $region115: #{architecture_forward.1} parent=103 // pred_region
          %1505 = vst.msk [vmem:[#allocation3] sm:$0xff] %vm984, %v1497
        $region116: #{architecture_forward.1} parent=103 // pred_fallthru
          _
        %v1506 = vld [vmem:[#allocation3] sm:$0xff]
        %1507 = vst.msk [vmem:[%s878] sm:$0xff] %vm984, %v1506
        %s1508 = sand.u32 %s586, 1
        %s1509 = scalar_lea.sflag [#allocation5], %s1508
        %s1510 = sand.u32 %s586, 1
        %s1511 = smul.addr %s1510, 8
        %s1512 = scalar_lea.vmem [#allocation4], %s1511
        // Predicated region
        $region117: #{architecture_forward.1} parent=103 // pred_check
          %p1513 = pneg %p596
        $region118: #{architecture_forward.1} parent=103 // pred_check_branch
          %1515 = sbr.rel (%p1513) target = $region120
        $region119: #{architecture_forward.1} parent=103 // pred_region
          %1517 = vsyncadd %s1509, 0
          %s1518 = smul.addr %s39, 8
          %s1519 = scalar_lea.hbm %s21, %s1518
          %s1521 = sshll.u32 %s1512, 4
          %s1522 = int_to_ptr.vmem [resolvable:$true] %s1521
          %s1523 = sshll.u32 %s1519, 4
          %s1524 = int_to_ptr.hbm [resolvable:$true] %s1523
          %1526 = dma.vmem_to_hbm [thread:$0]  %s1522, 128, %s1524, %s1509
        $region120: #{architecture_forward.1} parent=103 // pred_fallthru
          _
      $region104: #{architecture_forward.1} parent=5 // pred_fallthru
        _
      %p1527 = scmp.le.s32.totalorder 2, %s30
      // Predicated region
      $region121: #{architecture_forward.1} parent=5 // pred_check
        %p1528 = pneg %p1527
      $region122: #{architecture_forward.1} parent=5 // pred_check_branch
        %1530 = sbr.rel (%p1528) target = $region124
      $region123: #{architecture_forward.1} parent=5 // pred_region
        %s1531 = ssub.s32 %s30, 2
        // Predicated region
        $region125: #{architecture_forward.1} parent=123 // pred_check
          %p1532 = pneg %p602
        $region126: #{architecture_forward.1} parent=123 // pred_check_branch
          %1534 = sbr.rel (%p1532) target = $region128
        $region127: #{architecture_forward.1} parent=123 // pred_region
          %s1535 = sand.u32 %s587, 1
          %s1536 = scalar_lea.sflag [#allocation5], %s1535
          %s1537 = sand.u32 %s587, 1
          %s1538 = smul.addr %s1537, 8
          %s1539 = scalar_lea.vmem [#allocation4], %s1538
          %1541 = dma.done %s1536, 128
        $region128: #{architecture_forward.1} parent=123 // pred_fallthru
          _
      $region124: #{architecture_forward.1} parent=5 // pred_fallthru
        _
    $region6: #{architecture_forward.1} parent=1 // loop_footer
      %s34 = sadd.s32 1, %s30
    $region7: #{architecture_forward.1} parent=1 // loop_footer_branch
      %29 = sbr.rel target = $region3
    $region8: #{architecture_forward.1} parent=1 // loop_exit
      _
    %1542 = vsyncpa [#allocation5], 1
    %s1543 = scalar_lea.sflag [#allocation5], 1
    %1544 = vsyncpa %s1543, 1

</llo_original>
